<compile_context>
chip_gen: v7x
topology: tpu7x:2x2x1
jax: 0.10.0
libtpu: 0.0.40
codegen_flags: <defaults>
</compile_context>

<pallas_src>
import functools

import jax
import jax.numpy as jnp
from jax.experimental import pallas as pl
from jax.experimental.pallas import tpu as pltpu

INPUT_SIZE = 28
HIDDEN = 64
NUM_CLASSES = 10

HP = 128              # hidden padded to one full 128-lane tile per gate
GP = 4 * HP           # padded gate width (i, f, g, o), each 128-lane aligned
CP = 128              # classifier output padded to a full lane tile
SUBLANE = 8           # batch padded up to a whole sublane group


def lstm_kernel(x_ref, wih_ref, whh_ref, b_ref, wout_ref, bout_ref, out_ref, gx_ref,
                *, seq_len, batch_p):
    """Whole-sequence LSTM + classifier in one invocation.

    x_ref    : (S*BP, I)   time-major flattened inputs (row s*BP + b), batch zero-padded
    wih_ref  : (I, GP)     W_ih^T, gate cols 128-lane aligned, i/f/o cols pre-scaled by 0.5
    whh_ref  : (HP, GP)    W_hh^T, zero-padded, i/f/o cols pre-scaled by 0.5, bf16
    b_ref    : (1, GP)     b_ih + b_hh, i/f/o entries pre-scaled by 0.5, zero pad lanes
    wout_ref : (HP, CP)    W_out^T zero-padded
    bout_ref : (1, CP)
    out_ref  : (BP, CP)    logits; first B rows / NUM_CLASSES lanes valid
    gx_ref   : (S*BP, GP)  VMEM scratch: hoisted input projection for all timesteps
    """
    S, BP = seq_len, batch_p

    # ---- Pre-pass: input projection for ALL timesteps as one MXU matmul (off the chain). ----
    gx_ref[...] = jnp.dot(x_ref[...], wih_ref[...],
                          preferred_element_type=jnp.float32) + b_ref[...]

    h = jnp.zeros((BP, HP), jnp.float32)
    c = jnp.zeros((BP, HP), jnp.float32)

    # Small static trip count -> fully unrolled recurrence, 8-aligned static slices.
    # Per step: one bf16 (BP, HP) @ (HP, GP) MXU matmul (f32 acc) + one tanh over the full
    # gate tensor + tanh(c) on the EUP + full-128-lane VPU fixups.
    for t in range(S):
        rec = jnp.dot(h.astype(jnp.bfloat16), whh_ref[...],
                      preferred_element_type=jnp.float32)            # (BP, GP)
        gates = gx_ref[pl.ds(t * BP, BP), :] + rec                    # aligned (8, GP) slice
        t_all = jnp.tanh(gates)                                       # one EUP pass, all gates
        # PyTorch gate order (i, f, g, o). i/f/o pre-activations were pre-scaled by 0.5 in
        # the weights/bias, so sigmoid(x) == 0.5 * tanh(x/2) + 0.5 == 0.5 * t + 0.5 here.
        i_g = 0.5 * t_all[:, 0 * HP:1 * HP] + 0.5
        f_g = 0.5 * t_all[:, 1 * HP:2 * HP] + 0.5
        g_g = t_all[:, 2 * HP:3 * HP]
        o_g = 0.5 * t_all[:, 3 * HP:4 * HP] + 0.5
        # Pad lanes: gates==0 -> i=f=o=0.5, g=0 -> c_pad stays 0, h_pad stays 0 (exact).
        c = f_g * c + i_g * g_g
        h = o_g * jnp.tanh(c)

    # ---- Classifier on the last hidden state (lane-dense padded output, unmasked store). ----
    logits = jnp.dot(h, wout_ref[...],
                     preferred_element_type=jnp.float32) + bout_ref[...]
    out_ref[...] = logits.astype(out_ref.dtype)


# Sigmoid-as-tanh fold: scale i/f/o gate columns by 0.5, leave g (tanh) alone.
_GATE_SCALE = (0.5, 0.5, 1.0, 0.5)   # PyTorch gate order (i, f, g, o)


def _pad_gate_cols(w_t, H, Hp):
    """(D, 4H) -> (D, 4*Hp): each gate's H cols at a 128-lane-aligned offset, i/f/o * 0.5."""
    D = w_t.shape[0]
    scale = jnp.asarray(_GATE_SCALE, w_t.dtype).reshape(1, 4, 1)
    w3 = w_t.reshape(D, 4, H) * scale
    w3 = jnp.pad(w3, ((0, 0), (0, 0), (0, Hp - H)))
    return w3.reshape(D, 4 * Hp)


@jax.jit
def my_rnn_forward(x, w_ih, w_hh, b_ih, b_hh, w_out, b_out):
    """x: (B, S, I) float32 (batch_first, like PyTorch). Returns logits (B, 10)."""
    B, S, I = x.shape
    H = HIDDEN
    C = NUM_CLASSES
    BP = max(SUBLANE, ((B + SUBLANE - 1) // SUBLANE) * SUBLANE)   # pad batch to sublane group

    # Layout plumbing (one-time, wrapper-side).
    x_p = jnp.pad(x, ((0, BP - B), (0, 0), (0, 0)))                     # zero pad-batch rows
    x2d = jnp.transpose(x_p, (1, 0, 2)).reshape(S * BP, I)              # time-major rows

    wih_p = _pad_gate_cols(jnp.transpose(w_ih), H, HP)                  # (I, GP) f32
    whh_p = _pad_gate_cols(jnp.transpose(w_hh), H, HP)                  # (H, GP)
    whh_p = jnp.pad(whh_p, ((0, HP - H), (0, 0))).astype(jnp.bfloat16)  # (HP, GP) bf16
    bias = (b_ih + b_hh).reshape(4, H) * jnp.asarray(_GATE_SCALE, jnp.float32)[:, None]
    b_p = jnp.pad(bias, ((0, 0), (0, HP - H))).reshape(1, GP)           # (1, GP)
    wout_p = jnp.pad(jnp.transpose(w_out), ((0, HP - H), (0, CP - C)))  # (HP, CP)
    bout_p = jnp.pad(b_out.reshape(1, C), ((0, 0), (0, CP - C)))        # (1, CP)

    kernel = functools.partial(lstm_kernel, seq_len=S, batch_p=BP)

    out_padded = pl.pallas_call(
        kernel,
        out_shape=jax.ShapeDtypeStruct((BP, CP), jnp.float32),
        scratch_shapes=[pltpu.VMEM((S * BP, GP), jnp.float32)],   # staged input projection
    )(x2d, wih_p, whh_p, b_p, wout_p, bout_p)

    # Pad batch rows develop nonzero h/c (gates = bias for zero inputs); slice them away.
    return out_padded[:B, :C]


def ref_forward(x, w_ih, w_hh, b_ih, b_hh, w_out, b_out):
    """Pure-JAX f32 reference matching torch.nn.LSTM + Linear."""
    B = x.shape[0]
    H = HIDDEN

    def step(carry, x_t):
        h, c = carry
        gates = x_t @ w_ih.T + h @ w_hh.T + b_ih + b_hh
        i, f, g, o = jnp.split(gates, 4, axis=-1)
        i = jax.nn.sigmoid(i)
        f = jax.nn.sigmoid(f)
        g = jnp.tanh(g)
        o = jax.nn.sigmoid(o)
        c = f * c + i * g
        h = o * jnp.tanh(c)
        return (h, c), h

    h0 = jnp.zeros((B, H), jnp.float32)
    c0 = jnp.zeros((B, H), jnp.float32)
    (h_last, _), _ = jax.lax.scan(step, (h0, c0), jnp.transpose(x, (1, 0, 2)))
    return h_last @ w_out.T + b_out


if __name__ == "__main__":
    key = jax.random.PRNGKey(0)
    B, S, I, H, C = 2, 8, INPUT_SIZE, HIDDEN, NUM_CLASSES

    ks = jax.random.split(key, 8)
    scale = 1.0 / jnp.sqrt(jnp.float32(H))   # PyTorch-style uniform init bound
    w_ih = jax.random.uniform(ks[0], (4 * H, I), jnp.float32, -scale, scale)
    w_hh = jax.random.uniform(ks[1], (4 * H, H), jnp.float32, -scale, scale)
    b_ih = jax.random.uniform(ks[2], (4 * H,), jnp.float32, -scale, scale)
    b_hh = jax.random.uniform(ks[3], (4 * H,), jnp.float32, -scale, scale)
    w_out = jax.random.uniform(ks[4], (C, H), jnp.float32, -scale, scale)
    b_out = jax.random.uniform(ks[5], (C,), jnp.float32, -scale, scale)
    x = jax.random.normal(ks[6], (B, S, I), jnp.float32)

    out = my_rnn_forward(x, w_ih, w_hh, b_ih, b_hh, w_out, b_out)
    out = jax.block_until_ready(out)

    ref = ref_forward(x, w_ih, w_hh, b_ih, b_hh, w_out, b_out)
    assert out.shape == (B, C)
    # bf16 MXU inputs on the recurrent matmul (f32 accumulate/state) -> loosened tolerance
    # vs. the pure-f32 reference, per the perf review.
    assert jnp.allclose(out, ref, atol=2e-2, rtol=2e-2), "mismatch vs reference"

    print("KERNEL_OK")
</pallas_src>

<mosaic_0001>
module attributes {stable_mosaic.version = 11 : i64} {
  func.func @lstm_kernel(%arg0: memref<64x28xf32, #tpu.memory_space<vmem>>, %arg1: memref<28x512xf32, #tpu.memory_space<vmem>>, %arg2: memref<128x512xbf16, #tpu.memory_space<vmem>>, %arg3: memref<1x512xf32, #tpu.memory_space<vmem>>, %arg4: memref<128x128xf32, #tpu.memory_space<vmem>>, %arg5: memref<1x128xf32, #tpu.memory_space<vmem>>, %arg6: memref<8x128xf32, #tpu.memory_space<vmem>>, %arg7: memref<64x512xf32, #tpu.memory_space<vmem>>) attributes {dimension_semantics = [], scalar_prefetch = 0 : i64, scratch_operands = 1 : i64, tpu.core_type = #tpu.core_type<tc>} {
    %c0 = arith.constant 0 : index
    %c0_0 = arith.constant 0 : index
    %0 = vector.load %arg0[%c0, %c0_0] : memref<64x28xf32, #tpu.memory_space<vmem>>, vector<64x28xf32>
    %c0_1 = arith.constant 0 : index
    %c0_2 = arith.constant 0 : index
    %1 = vector.load %arg1[%c0_1, %c0_2] : memref<28x512xf32, #tpu.memory_space<vmem>>, vector<28x512xf32>
    %cst = arith.constant dense<0.000000e+00> : vector<64x512xf32>
    %2 = tpu.matmul %0, %1, %cst {dimension_numbers = #tpu.dot_dimension_numbers<[1], [0], [0], [1], [0, 0, 1, 1], [], []>} : vector<64x28xf32>, vector<28x512xf32>, vector<64x512xf32> -> vector<64x512xf32>
    %c0_3 = arith.constant 0 : index
    %c0_4 = arith.constant 0 : index
    %3 = vector.load %arg3[%c0_3, %c0_4] : memref<1x512xf32, #tpu.memory_space<vmem>>, vector<1x512xf32>
    %4 = vector.broadcast %3 : vector<1x512xf32> to vector<64x512xf32>
    %5 = arith.addf %2, %4 : vector<64x512xf32>
    %c0_5 = arith.constant 0 : index
    %c0_6 = arith.constant 0 : index
    %6 = vector.load %arg7[%c0_5, %c0_6] : memref<64x512xf32, #tpu.memory_space<vmem>>, vector<64x512xf32>
    tpu.vector_store %arg7[%c0_5, %c0_6], %5 {strides = array<i32>} : memref<64x512xf32, #tpu.memory_space<vmem>>, vector<64x512xf32>,
    %cst_7 = arith.constant 0.000000e+00 : f32
    %7 = vector.broadcast %cst_7 : f32 to vector<8x128xf32>
    %cst_8 = arith.constant 0.000000e+00 : f32
    %8 = vector.broadcast %cst_8 : f32 to vector<8x128xf32>
    %9 = arith.truncf %7 : vector<8x128xf32> to vector<8x128xbf16>
    %c0_9 = arith.constant 0 : index
    %c0_10 = arith.constant 0 : index
    %10 = vector.load %arg2[%c0_9, %c0_10] : memref<128x512xbf16, #tpu.memory_space<vmem>>, vector<128x512xbf16>
    %cst_11 = arith.constant dense<0.000000e+00> : vector<8x512xf32>
    %11 = tpu.matmul %9, %10, %cst_11 {dimension_numbers = #tpu.dot_dimension_numbers<[1], [0], [0], [1], [0, 0, 1, 1], [], []>} : vector<8x128xbf16>, vector<128x512xbf16>, vector<8x512xf32> -> vector<8x512xf32>
    %c0_12 = arith.constant 0 : index
    %c0_13 = arith.constant 0 : index
    %12 = vector.load %arg7[%c0_12, %c0_13] : memref<64x512xf32, #tpu.memory_space<vmem>>, vector<8x512xf32>
    %13 = arith.addf %12, %11 : vector<8x512xf32>
    %14 = math.tanh %13 : vector<8x512xf32>
    %15 = vector.extract_strided_slice %14 {offsets = [0, 0], sizes = [8, 128], strides = [1, 1]} : vector<8x512xf32> to vector<8x128xf32>
    %cst_14 = arith.constant 5.000000e-01 : f32
    %16 = vector.broadcast %cst_14 : f32 to vector<8x128xf32>
    %17 = arith.mulf %16, %15 : vector<8x128xf32>
    %cst_15 = arith.constant 5.000000e-01 : f32
    %18 = vector.broadcast %cst_15 : f32 to vector<8x128xf32>
    %19 = arith.addf %17, %18 : vector<8x128xf32>
    %20 = vector.extract_strided_slice %14 {offsets = [0, 128], sizes = [8, 128], strides = [1, 1]} : vector<8x512xf32> to vector<8x128xf32>
    %cst_16 = arith.constant 5.000000e-01 : f32
    %21 = vector.broadcast %cst_16 : f32 to vector<8x128xf32>
    %22 = arith.mulf %21, %20 : vector<8x128xf32>
    %cst_17 = arith.constant 5.000000e-01 : f32
    %23 = vector.broadcast %cst_17 : f32 to vector<8x128xf32>
    %24 = arith.addf %22, %23 : vector<8x128xf32>
    %25 = vector.extract_strided_slice %14 {offsets = [0, 256], sizes = [8, 128], strides = [1, 1]} : vector<8x512xf32> to vector<8x128xf32>
    %26 = vector.extract_strided_slice %14 {offsets = [0, 384], sizes = [8, 128], strides = [1, 1]} : vector<8x512xf32> to vector<8x128xf32>
    %cst_18 = arith.constant 5.000000e-01 : f32
    %27 = vector.broadcast %cst_18 : f32 to vector<8x128xf32>
    %28 = arith.mulf %27, %26 : vector<8x128xf32>
    %cst_19 = arith.constant 5.000000e-01 : f32
    %29 = vector.broadcast %cst_19 : f32 to vector<8x128xf32>
    %30 = arith.addf %28, %29 : vector<8x128xf32>
    %31 = arith.mulf %24, %8 : vector<8x128xf32>
    %32 = arith.mulf %19, %25 : vector<8x128xf32>
    %33 = arith.addf %31, %32 : vector<8x128xf32>
    %34 = math.tanh %33 : vector<8x128xf32>
    %35 = arith.mulf %30, %34 : vector<8x128xf32>
    %36 = arith.truncf %35 : vector<8x128xf32> to vector<8x128xbf16>
    %c0_20 = arith.constant 0 : index
    %c0_21 = arith.constant 0 : index
    %37 = vector.load %arg2[%c0_20, %c0_21] : memref<128x512xbf16, #tpu.memory_space<vmem>>, vector<128x512xbf16>
    %cst_22 = arith.constant dense<0.000000e+00> : vector<8x512xf32>
    %38 = tpu.matmul %36, %37, %cst_22 {dimension_numbers = #tpu.dot_dimension_numbers<[1], [0], [0], [1], [0, 0, 1, 1], [], []>} : vector<8x128xbf16>, vector<128x512xbf16>, vector<8x512xf32> -> vector<8x512xf32>
    %c8 = arith.constant 8 : index
    %c0_23 = arith.constant 0 : index
    %39 = vector.load %arg7[%c8, %c0_23] : memref<64x512xf32, #tpu.memory_space<vmem>>, vector<8x512xf32>
    %40 = arith.addf %39, %38 : vector<8x512xf32>
    %41 = math.tanh %40 : vector<8x512xf32>
    %42 = vector.extract_strided_slice %41 {offsets = [0, 0], sizes = [8, 128], strides = [1, 1]} : vector<8x512xf32> to vector<8x128xf32>
    %cst_24 = arith.constant 5.000000e-01 : f32
    %43 = vector.broadcast %cst_24 : f32 to vector<8x128xf32>
    %44 = arith.mulf %43, %42 : vector<8x128xf32>
    %cst_25 = arith.constant 5.000000e-01 : f32
    %45 = vector.broadcast %cst_25 : f32 to vector<8x128xf32>
    %46 = arith.addf %44, %45 : vector<8x128xf32>
    %47 = vector.extract_strided_slice %41 {offsets = [0, 128], sizes = [8, 128], strides = [1, 1]} : vector<8x512xf32> to vector<8x128xf32>
    %cst_26 = arith.constant 5.000000e-01 : f32
    %48 = vector.broadcast %cst_26 : f32 to vector<8x128xf32>
    %49 = arith.mulf %48, %47 : vector<8x128xf32>
    %cst_27 = arith.constant 5.000000e-01 : f32
    %50 = vector.broadcast %cst_27 : f32 to vector<8x128xf32>
    %51 = arith.addf %49, %50 : vector<8x128xf32>
    %52 = vector.extract_strided_slice %41 {offsets = [0, 256], sizes = [8, 128], strides = [1, 1]} : vector<8x512xf32> to vector<8x128xf32>
    %53 = vector.extract_strided_slice %41 {offsets = [0, 384], sizes = [8, 128], strides = [1, 1]} : vector<8x512xf32> to vector<8x128xf32>
    %cst_28 = arith.constant 5.000000e-01 : f32
    %54 = vector.broadcast %cst_28 : f32 to vector<8x128xf32>
    %55 = arith.mulf %54, %53 : vector<8x128xf32>
    %cst_29 = arith.constant 5.000000e-01 : f32
    %56 = vector.broadcast %cst_29 : f32 to vector<8x128xf32>
    %57 = arith.addf %55, %56 : vector<8x128xf32>
    %58 = arith.mulf %51, %33 : vector<8x128xf32>
    %59 = arith.mulf %46, %52 : vector<8x128xf32>
    %60 = arith.addf %58, %59 : vector<8x128xf32>
    %61 = math.tanh %60 : vector<8x128xf32>
    %62 = arith.mulf %57, %61 : vector<8x128xf32>
    %63 = arith.truncf %62 : vector<8x128xf32> to vector<8x128xbf16>
    %c0_30 = arith.constant 0 : index
    %c0_31 = arith.constant 0 : index
    %64 = vector.load %arg2[%c0_30, %c0_31] : memref<128x512xbf16, #tpu.memory_space<vmem>>, vector<128x512xbf16>
    %cst_32 = arith.constant dense<0.000000e+00> : vector<8x512xf32>
    %65 = tpu.matmul %63, %64, %cst_32 {dimension_numbers = #tpu.dot_dimension_numbers<[1], [0], [0], [1], [0, 0, 1, 1], [], []>} : vector<8x128xbf16>, vector<128x512xbf16>, vector<8x512xf32> -> vector<8x512xf32>
    %c16 = arith.constant 16 : index
    %c0_33 = arith.constant 0 : index
    %66 = vector.load %arg7[%c16, %c0_33] : memref<64x512xf32, #tpu.memory_space<vmem>>, vector<8x512xf32>
    %67 = arith.addf %66, %65 : vector<8x512xf32>
    %68 = math.tanh %67 : vector<8x512xf32>
    %69 = vector.extract_strided_slice %68 {offsets = [0, 0], sizes = [8, 128], strides = [1, 1]} : vector<8x512xf32> to vector<8x128xf32>
    %cst_34 = arith.constant 5.000000e-01 : f32
    %70 = vector.broadcast %cst_34 : f32 to vector<8x128xf32>
    %71 = arith.mulf %70, %69 : vector<8x128xf32>
    %cst_35 = arith.constant 5.000000e-01 : f32
    %72 = vector.broadcast %cst_35 : f32 to vector<8x128xf32>
    %73 = arith.addf %71, %72 : vector<8x128xf32>
    %74 = vector.extract_strided_slice %68 {offsets = [0, 128], sizes = [8, 128], strides = [1, 1]} : vector<8x512xf32> to vector<8x128xf32>
    %cst_36 = arith.constant 5.000000e-01 : f32
    %75 = vector.broadcast %cst_36 : f32 to vector<8x128xf32>
    %76 = arith.mulf %75, %74 : vector<8x128xf32>
    %cst_37 = arith.constant 5.000000e-01 : f32
    %77 = vector.broadcast %cst_37 : f32 to vector<8x128xf32>
    %78 = arith.addf %76, %77 : vector<8x128xf32>
    %79 = vector.extract_strided_slice %68 {offsets = [0, 256], sizes = [8, 128], strides = [1, 1]} : vector<8x512xf32> to vector<8x128xf32>
    %80 = vector.extract_strided_slice %68 {offsets = [0, 384], sizes = [8, 128], strides = [1, 1]} : vector<8x512xf32> to vector<8x128xf32>
    %cst_38 = arith.constant 5.000000e-01 : f32
    %81 = vector.broadcast %cst_38 : f32 to vector<8x128xf32>
    %82 = arith.mulf %81, %80 : vector<8x128xf32>
    %cst_39 = arith.constant 5.000000e-01 : f32
    %83 = vector.broadcast %cst_39 : f32 to vector<8x128xf32>
    %84 = arith.addf %82, %83 : vector<8x128xf32>
    %85 = arith.mulf %78, %60 : vector<8x128xf32>
    %86 = arith.mulf %73, %79 : vector<8x128xf32>
    %87 = arith.addf %85, %86 : vector<8x128xf32>
    %88 = math.tanh %87 : vector<8x128xf32>
    %89 = arith.mulf %84, %88 : vector<8x128xf32>
    %90 = arith.truncf %89 : vector<8x128xf32> to vector<8x128xbf16>
    %c0_40 = arith.constant 0 : index
    %c0_41 = arith.constant 0 : index
    %91 = vector.load %arg2[%c0_40, %c0_41] : memref<128x512xbf16, #tpu.memory_space<vmem>>, vector<128x512xbf16>
    %cst_42 = arith.constant dense<0.000000e+00> : vector<8x512xf32>
    %92 = tpu.matmul %90, %91, %cst_42 {dimension_numbers = #tpu.dot_dimension_numbers<[1], [0], [0], [1], [0, 0, 1, 1], [], []>} : vector<8x128xbf16>, vector<128x512xbf16>, vector<8x512xf32> -> vector<8x512xf32>
    %c24 = arith.constant 24 : index
    %c0_43 = arith.constant 0 : index
    %93 = vector.load %arg7[%c24, %c0_43] : memref<64x512xf32, #tpu.memory_space<vmem>>, vector<8x512xf32>
    %94 = arith.addf %93, %92 : vector<8x512xf32>
    %95 = math.tanh %94 : vector<8x512xf32>
    %96 = vector.extract_strided_slice %95 {offsets = [0, 0], sizes = [8, 128], strides = [1, 1]} : vector<8x512xf32> to vector<8x128xf32>
    %cst_44 = arith.constant 5.000000e-01 : f32
    %97 = vector.broadcast %cst_44 : f32 to vector<8x128xf32>
    %98 = arith.mulf %97, %96 : vector<8x128xf32>
    %cst_45 = arith.constant 5.000000e-01 : f32
    %99 = vector.broadcast %cst_45 : f32 to vector<8x128xf32>
    %100 = arith.addf %98, %99 : vector<8x128xf32>
    %101 = vector.extract_strided_slice %95 {offsets = [0, 128], sizes = [8, 128], strides = [1, 1]} : vector<8x512xf32> to vector<8x128xf32>
    %cst_46 = arith.constant 5.000000e-01 : f32
    %102 = vector.broadcast %cst_46 : f32 to vector<8x128xf32>
    %103 = arith.mulf %102, %101 : vector<8x128xf32>
    %cst_47 = arith.constant 5.000000e-01 : f32
    %104 = vector.broadcast %cst_47 : f32 to vector<8x128xf32>
    %105 = arith.addf %103, %104 : vector<8x128xf32>
    %106 = vector.extract_strided_slice %95 {offsets = [0, 256], sizes = [8, 128], strides = [1, 1]} : vector<8x512xf32> to vector<8x128xf32>
    %107 = vector.extract_strided_slice %95 {offsets = [0, 384], sizes = [8, 128], strides = [1, 1]} : vector<8x512xf32> to vector<8x128xf32>
    %cst_48 = arith.constant 5.000000e-01 : f32
    %108 = vector.broadcast %cst_48 : f32 to vector<8x128xf32>
    %109 = arith.mulf %108, %107 : vector<8x128xf32>
    %cst_49 = arith.constant 5.000000e-01 : f32
    %110 = vector.broadcast %cst_49 : f32 to vector<8x128xf32>
    %111 = arith.addf %109, %110 : vector<8x128xf32>
    %112 = arith.mulf %105, %87 : vector<8x128xf32>
    %113 = arith.mulf %100, %106 : vector<8x128xf32>
    %114 = arith.addf %112, %113 : vector<8x128xf32>
    %115 = math.tanh %114 : vector<8x128xf32>
    %116 = arith.mulf %111, %115 : vector<8x128xf32>
    %117 = arith.truncf %116 : vector<8x128xf32> to vector<8x128xbf16>
    %c0_50 = arith.constant 0 : index
    %c0_51 = arith.constant 0 : index
    %118 = vector.load %arg2[%c0_50, %c0_51] : memref<128x512xbf16, #tpu.memory_space<vmem>>, vector<128x512xbf16>
    %cst_52 = arith.constant dense<0.000000e+00> : vector<8x512xf32>
    %119 = tpu.matmul %117, %118, %cst_52 {dimension_numbers = #tpu.dot_dimension_numbers<[1], [0], [0], [1], [0, 0, 1, 1], [], []>} : vector<8x128xbf16>, vector<128x512xbf16>, vector<8x512xf32> -> vector<8x512xf32>
    %c32 = arith.constant 32 : index
    %c0_53 = arith.constant 0 : index
    %120 = vector.load %arg7[%c32, %c0_53] : memref<64x512xf32, #tpu.memory_space<vmem>>, vector<8x512xf32>
    %121 = arith.addf %120, %119 : vector<8x512xf32>
    %122 = math.tanh %121 : vector<8x512xf32>
    %123 = vector.extract_strided_slice %122 {offsets = [0, 0], sizes = [8, 128], strides = [1, 1]} : vector<8x512xf32> to vector<8x128xf32>
    %cst_54 = arith.constant 5.000000e-01 : f32
    %124 = vector.broadcast %cst_54 : f32 to vector<8x128xf32>
    %125 = arith.mulf %124, %123 : vector<8x128xf32>
    %cst_55 = arith.constant 5.000000e-01 : f32
    %126 = vector.broadcast %cst_55 : f32 to vector<8x128xf32>
    %127 = arith.addf %125, %126 : vector<8x128xf32>
    %128 = vector.extract_strided_slice %122 {offsets = [0, 128], sizes = [8, 128], strides = [1, 1]} : vector<8x512xf32> to vector<8x128xf32>
    %cst_56 = arith.constant 5.000000e-01 : f32
    %129 = vector.broadcast %cst_56 : f32 to vector<8x128xf32>
    %130 = arith.mulf %129, %128 : vector<8x128xf32>
    %cst_57 = arith.constant 5.000000e-01 : f32
    %131 = vector.broadcast %cst_57 : f32 to vector<8x128xf32>
    %132 = arith.addf %130, %131 : vector<8x128xf32>
    %133 = vector.extract_strided_slice %122 {offsets = [0, 256], sizes = [8, 128], strides = [1, 1]} : vector<8x512xf32> to vector<8x128xf32>
    %134 = vector.extract_strided_slice %122 {offsets = [0, 384], sizes = [8, 128], strides = [1, 1]} : vector<8x512xf32> to vector<8x128xf32>
    %cst_58 = arith.constant 5.000000e-01 : f32
    %135 = vector.broadcast %cst_58 : f32 to vector<8x128xf32>
    %136 = arith.mulf %135, %134 : vector<8x128xf32>
    %cst_59 = arith.constant 5.000000e-01 : f32
    %137 = vector.broadcast %cst_59 : f32 to vector<8x128xf32>
    %138 = arith.addf %136, %137 : vector<8x128xf32>
    %139 = arith.mulf %132, %114 : vector<8x128xf32>
    %140 = arith.mulf %127, %133 : vector<8x128xf32>
    %141 = arith.addf %139, %140 : vector<8x128xf32>
    %142 = math.tanh %141 : vector<8x128xf32>
    %143 = arith.mulf %138, %142 : vector<8x128xf32>
    %144 = arith.truncf %143 : vector<8x128xf32> to vector<8x128xbf16>
    %c0_60 = arith.constant 0 : index
    %c0_61 = arith.constant 0 : index
    %145 = vector.load %arg2[%c0_60, %c0_61] : memref<128x512xbf16, #tpu.memory_space<vmem>>, vector<128x512xbf16>
    %cst_62 = arith.constant dense<0.000000e+00> : vector<8x512xf32>
    %146 = tpu.matmul %144, %145, %cst_62 {dimension_numbers = #tpu.dot_dimension_numbers<[1], [0], [0], [1], [0, 0, 1, 1], [], []>} : vector<8x128xbf16>, vector<128x512xbf16>, vector<8x512xf32> -> vector<8x512xf32>
    %c40 = arith.constant 40 : index
    %c0_63 = arith.constant 0 : index
    %147 = vector.load %arg7[%c40, %c0_63] : memref<64x512xf32, #tpu.memory_space<vmem>>, vector<8x512xf32>
    %148 = arith.addf %147, %146 : vector<8x512xf32>
    %149 = math.tanh %148 : vector<8x512xf32>
    %150 = vector.extract_strided_slice %149 {offsets = [0, 0], sizes = [8, 128], strides = [1, 1]} : vector<8x512xf32> to vector<8x128xf32>
    %cst_64 = arith.constant 5.000000e-01 : f32
    %151 = vector.broadcast %cst_64 : f32 to vector<8x128xf32>
    %152 = arith.mulf %151, %150 : vector<8x128xf32>
    %cst_65 = arith.constant 5.000000e-01 : f32
    %153 = vector.broadcast %cst_65 : f32 to vector<8x128xf32>
    %154 = arith.addf %152, %153 : vector<8x128xf32>
    %155 = vector.extract_strided_slice %149 {offsets = [0, 128], sizes = [8, 128], strides = [1, 1]} : vector<8x512xf32> to vector<8x128xf32>
    %cst_66 = arith.constant 5.000000e-01 : f32
    %156 = vector.broadcast %cst_66 : f32 to vector<8x128xf32>
    %157 = arith.mulf %156, %155 : vector<8x128xf32>
    %cst_67 = arith.constant 5.000000e-01 : f32
    %158 = vector.broadcast %cst_67 : f32 to vector<8x128xf32>
    %159 = arith.addf %157, %158 : vector<8x128xf32>
    %160 = vector.extract_strided_slice %149 {offsets = [0, 256], sizes = [8, 128], strides = [1, 1]} : vector<8x512xf32> to vector<8x128xf32>
    %161 = vector.extract_strided_slice %149 {offsets = [0, 384], sizes = [8, 128], strides = [1, 1]} : vector<8x512xf32> to vector<8x128xf32>
    %cst_68 = arith.constant 5.000000e-01 : f32
    %162 = vector.broadcast %cst_68 : f32 to vector<8x128xf32>
    %163 = arith.mulf %162, %161 : vector<8x128xf32>
    %cst_69 = arith.constant 5.000000e-01 : f32
    %164 = vector.broadcast %cst_69 : f32 to vector<8x128xf32>
    %165 = arith.addf %163, %164 : vector<8x128xf32>
    %166 = arith.mulf %159, %141 : vector<8x128xf32>
    %167 = arith.mulf %154, %160 : vector<8x128xf32>
    %168 = arith.addf %166, %167 : vector<8x128xf32>
    %169 = math.tanh %168 : vector<8x128xf32>
    %170 = arith.mulf %165, %169 : vector<8x128xf32>
    %171 = arith.truncf %170 : vector<8x128xf32> to vector<8x128xbf16>
    %c0_70 = arith.constant 0 : index
    %c0_71 = arith.constant 0 : index
    %172 = vector.load %arg2[%c0_70, %c0_71] : memref<128x512xbf16, #tpu.memory_space<vmem>>, vector<128x512xbf16>
    %cst_72 = arith.constant dense<0.000000e+00> : vector<8x512xf32>
    %173 = tpu.matmul %171, %172, %cst_72 {dimension_numbers = #tpu.dot_dimension_numbers<[1], [0], [0], [1], [0, 0, 1, 1], [], []>} : vector<8x128xbf16>, vector<128x512xbf16>, vector<8x512xf32> -> vector<8x512xf32>
    %c48 = arith.constant 48 : index
    %c0_73 = arith.constant 0 : index
    %174 = vector.load %arg7[%c48, %c0_73] : memref<64x512xf32, #tpu.memory_space<vmem>>, vector<8x512xf32>
    %175 = arith.addf %174, %173 : vector<8x512xf32>
    %176 = math.tanh %175 : vector<8x512xf32>
    %177 = vector.extract_strided_slice %176 {offsets = [0, 0], sizes = [8, 128], strides = [1, 1]} : vector<8x512xf32> to vector<8x128xf32>
    %cst_74 = arith.constant 5.000000e-01 : f32
    %178 = vector.broadcast %cst_74 : f32 to vector<8x128xf32>
    %179 = arith.mulf %178, %177 : vector<8x128xf32>
    %cst_75 = arith.constant 5.000000e-01 : f32
    %180 = vector.broadcast %cst_75 : f32 to vector<8x128xf32>
    %181 = arith.addf %179, %180 : vector<8x128xf32>
    %182 = vector.extract_strided_slice %176 {offsets = [0, 128], sizes = [8, 128], strides = [1, 1]} : vector<8x512xf32> to vector<8x128xf32>
    %cst_76 = arith.constant 5.000000e-01 : f32
    %183 = vector.broadcast %cst_76 : f32 to vector<8x128xf32>
    %184 = arith.mulf %183, %182 : vector<8x128xf32>
    %cst_77 = arith.constant 5.000000e-01 : f32
    %185 = vector.broadcast %cst_77 : f32 to vector<8x128xf32>
    %186 = arith.addf %184, %185 : vector<8x128xf32>
    %187 = vector.extract_strided_slice %176 {offsets = [0, 256], sizes = [8, 128], strides = [1, 1]} : vector<8x512xf32> to vector<8x128xf32>
    %188 = vector.extract_strided_slice %176 {offsets = [0, 384], sizes = [8, 128], strides = [1, 1]} : vector<8x512xf32> to vector<8x128xf32>
    %cst_78 = arith.constant 5.000000e-01 : f32
    %189 = vector.broadcast %cst_78 : f32 to vector<8x128xf32>
    %190 = arith.mulf %189, %188 : vector<8x128xf32>
    %cst_79 = arith.constant 5.000000e-01 : f32
    %191 = vector.broadcast %cst_79 : f32 to vector<8x128xf32>
    %192 = arith.addf %190, %191 : vector<8x128xf32>
    %193 = arith.mulf %186, %168 : vector<8x128xf32>
    %194 = arith.mulf %181, %187 : vector<8x128xf32>
    %195 = arith.addf %193, %194 : vector<8x128xf32>
    %196 = math.tanh %195 : vector<8x128xf32>
    %197 = arith.mulf %192, %196 : vector<8x128xf32>
    %198 = arith.truncf %197 : vector<8x128xf32> to vector<8x128xbf16>
    %c0_80 = arith.constant 0 : index
    %c0_81 = arith.constant 0 : index
    %199 = vector.load %arg2[%c0_80, %c0_81] : memref<128x512xbf16, #tpu.memory_space<vmem>>, vector<128x512xbf16>
    %cst_82 = arith.constant dense<0.000000e+00> : vector<8x512xf32>
    %200 = tpu.matmul %198, %199, %cst_82 {dimension_numbers = #tpu.dot_dimension_numbers<[1], [0], [0], [1], [0, 0, 1, 1], [], []>} : vector<8x128xbf16>, vector<128x512xbf16>, vector<8x512xf32> -> vector<8x512xf32>
    %c56 = arith.constant 56 : index
    %c0_83 = arith.constant 0 : index
    %201 = vector.load %arg7[%c56, %c0_83] : memref<64x512xf32, #tpu.memory_space<vmem>>, vector<8x512xf32>
    %202 = arith.addf %201, %200 : vector<8x512xf32>
    %203 = math.tanh %202 : vector<8x512xf32>
    %204 = vector.extract_strided_slice %203 {offsets = [0, 0], sizes = [8, 128], strides = [1, 1]} : vector<8x512xf32> to vector<8x128xf32>
    %cst_84 = arith.constant 5.000000e-01 : f32
    %205 = vector.broadcast %cst_84 : f32 to vector<8x128xf32>
    %206 = arith.mulf %205, %204 : vector<8x128xf32>
    %cst_85 = arith.constant 5.000000e-01 : f32
    %207 = vector.broadcast %cst_85 : f32 to vector<8x128xf32>
    %208 = arith.addf %206, %207 : vector<8x128xf32>
    %209 = vector.extract_strided_slice %203 {offsets = [0, 128], sizes = [8, 128], strides = [1, 1]} : vector<8x512xf32> to vector<8x128xf32>
    %cst_86 = arith.constant 5.000000e-01 : f32
    %210 = vector.broadcast %cst_86 : f32 to vector<8x128xf32>
    %211 = arith.mulf %210, %209 : vector<8x128xf32>
    %cst_87 = arith.constant 5.000000e-01 : f32
    %212 = vector.broadcast %cst_87 : f32 to vector<8x128xf32>
    %213 = arith.addf %211, %212 : vector<8x128xf32>
    %214 = vector.extract_strided_slice %203 {offsets = [0, 256], sizes = [8, 128], strides = [1, 1]} : vector<8x512xf32> to vector<8x128xf32>
    %215 = vector.extract_strided_slice %203 {offsets = [0, 384], sizes = [8, 128], strides = [1, 1]} : vector<8x512xf32> to vector<8x128xf32>
    %cst_88 = arith.constant 5.000000e-01 : f32
    %216 = vector.broadcast %cst_88 : f32 to vector<8x128xf32>
    %217 = arith.mulf %216, %215 : vector<8x128xf32>
    %cst_89 = arith.constant 5.000000e-01 : f32
    %218 = vector.broadcast %cst_89 : f32 to vector<8x128xf32>
    %219 = arith.addf %217, %218 : vector<8x128xf32>
    %220 = arith.mulf %213, %195 : vector<8x128xf32>
    %221 = arith.mulf %208, %214 : vector<8x128xf32>
    %222 = arith.addf %220, %221 : vector<8x128xf32>
    %223 = math.tanh %222 : vector<8x128xf32>
    %224 = arith.mulf %219, %223 : vector<8x128xf32>
    %c0_90 = arith.constant 0 : index
    %c0_91 = arith.constant 0 : index
    %225 = vector.load %arg4[%c0_90, %c0_91] : memref<128x128xf32, #tpu.memory_space<vmem>>, vector<128x128xf32>
    %cst_92 = arith.constant dense<0.000000e+00> : vector<8x128xf32>
    %226 = tpu.matmul %224, %225, %cst_92 {dimension_numbers = #tpu.dot_dimension_numbers<[1], [0], [0], [1], [0, 0, 1, 1], [], []>} : vector<8x128xf32>, vector<128x128xf32>, vector<8x128xf32> -> vector<8x128xf32>
    %c0_93 = arith.constant 0 : index
    %c0_94 = arith.constant 0 : index
    %227 = vector.load %arg5[%c0_93, %c0_94] : memref<1x128xf32, #tpu.memory_space<vmem>>, vector<1x128xf32>
    %228 = vector.broadcast %227 : vector<1x128xf32> to vector<8x128xf32>
    %229 = arith.addf %226, %228 : vector<8x128xf32>
    %c0_95 = arith.constant 0 : index
    %c0_96 = arith.constant 0 : index
    %230 = vector.load %arg6[%c0_95, %c0_96] : memref<8x128xf32, #tpu.memory_space<vmem>>, vector<8x128xf32>
    tpu.vector_store %arg6[%c0_95, %c0_96], %229 {strides = array<i32>} : memref<8x128xf32, #tpu.memory_space<vmem>>, vector<8x128xf32>,
    return
  }
}

</mosaic_0001>

<llo_original>
// kernel: my_rnn_forward.1
$region0: #{my_rnn_forward.1}
  #allocation0 [shape = 'u32[]', space=smem, size = 0x4, offset = 0x4, fixed_abs, tag = 'smem constant byte address 0x4 - core index']
  #allocation1 [shape = 'u32[144,128]{1,0:T(1,128)}', space=vmem, size = 0x12000, scoped, tag = 'internal scratch']
  #allocation2 [shape = 'f32[64,512]{1,0:T(8,128)}', space=vmem, size = 0x20000, scoped, tag = 'scratch operand']
  %s0 = inlined_call_operand.vmem [shape: f32[64,28], index: 0, kind: input, shape index: {}]
  %s1 = inlined_call_operand.vmem [shape: f32[28,512], index: 1, kind: input, shape index: {}]
  %s2 = inlined_call_operand.vmem [shape: bf16[128,512], index: 2, kind: input, shape index: {}]
  %s3 = inlined_call_operand.vmem [shape: f32[1,512], index: 3, kind: input, shape index: {}]
  %s4 = inlined_call_operand.vmem [shape: f32[128,128], index: 4, kind: input, shape index: {}]
  %s5 = inlined_call_operand.vmem [shape: f32[1,128], index: 5, kind: input, shape index: {}]
  %s6 = inlined_call_operand.vmem [shape: f32[8,128], index: 6, kind: output, shape index: {}]
  %s7 = sld [smem:[#allocation0]]
  $region34: #{my_rnn_forward.1} parent=0
    _
  %s9 = ssub.s32 1, %s7
  %s10 = scalar_select 0, %s9, %s7
  // Predicated region
  $region2: #{my_rnn_forward.1} parent=0 // pred_check
    _
  $region3: #{my_rnn_forward.1} parent=0 // pred_check_branch
    %12 = sbr.rel (0) target = $region5
  $region4: #{my_rnn_forward.1} parent=0 // pred_region
    _
  $region5: #{my_rnn_forward.1} parent=0 // pred_fallthru
    _
  // Predicated region
  $region6: #{my_rnn_forward.1} parent=0 // pred_check
    _
  $region7: #{my_rnn_forward.1} parent=0 // pred_check_branch
    %14 = sbr.rel (0) target = $region9
  $region8: #{my_rnn_forward.1} parent=0 // pred_region
    _
  $region9: #{my_rnn_forward.1} parent=0 // pred_fallthru
    _
  // Predicated region
  $region10: #{my_rnn_forward.1} parent=0 // pred_check
    _
  $region11: #{my_rnn_forward.1} parent=0 // pred_check_branch
    %16 = sbr.rel (0) target = $region13
  $region12: #{my_rnn_forward.1} parent=0 // pred_region
    _
  $region13: #{my_rnn_forward.1} parent=0 // pred_fallthru
    _
  // Predicated region
  $region14: #{my_rnn_forward.1} parent=0 // pred_check
    _
  $region15: #{my_rnn_forward.1} parent=0 // pred_check_branch
    %18 = sbr.rel (0) target = $region17
  $region16: #{my_rnn_forward.1} parent=0 // pred_region
    _
  $region17: #{my_rnn_forward.1} parent=0 // pred_fallthru
    _
  // Predicated region
  $region18: #{my_rnn_forward.1} parent=0 // pred_check
    _
  $region19: #{my_rnn_forward.1} parent=0 // pred_check_branch
    %20 = sbr.rel (0) target = $region21
  $region20: #{my_rnn_forward.1} parent=0 // pred_region
    _
  $region21: #{my_rnn_forward.1} parent=0 // pred_fallthru
    _
  // Predicated region
  $region22: #{my_rnn_forward.1} parent=0 // pred_check
    _
  $region23: #{my_rnn_forward.1} parent=0 // pred_check_branch
    %22 = sbr.rel (0) target = $region25
  $region24: #{my_rnn_forward.1} parent=0 // pred_region
    _
  $region25: #{my_rnn_forward.1} parent=0 // pred_fallthru
    _
  %v24 = vld [vmem:[%s0] sm:$0xff]
  %v25 = vld [vmem:[%s0 + $0x8] sm:$0xff]
  %v26 = vld [vmem:[%s0 + $0x10] sm:$0xff]
  %v27 = vld [vmem:[%s0 + $0x18] sm:$0xff]
  %v28 = vld [vmem:[%s0 + $0x20] sm:$0xff]
  %v29 = vld [vmem:[%s0 + $0x28] sm:$0xff]
  %v30 = vld [vmem:[%s0 + $0x30] sm:$0xff]
  %v31 = vld [vmem:[%s0 + $0x38] sm:$0xff]
  %v32 = vld [vmem:[%s1] sm:$0xff]
  %v33 = vld [vmem:[%s1 + $0x8] sm:$0xff]
  %v34 = vld [vmem:[%s1 + $0x10] sm:$0xff]
  %v35 = vld [vmem:[%s1 + $0x18] sm:$0xff]
  %v36 = vld [vmem:[%s1 + $0x20] sm:$0xff]
  %v37 = vld [vmem:[%s1 + $0x28] sm:$0xff]
  %v38 = vld [vmem:[%s1 + $0x30] sm:$0xff]
  %v39 = vld [vmem:[%s1 + $0x38] sm:$0xff]
  %v40 = vld [vmem:[%s1 + $0x40] sm:$0xff]
  %v41 = vld [vmem:[%s1 + $0x48] sm:$0xff]
  %v42 = vld [vmem:[%s1 + $0x50] sm:$0xff]
  %v43 = vld [vmem:[%s1 + $0x58] sm:$0xff]
  %v44 = vld [vmem:[%s1 + $0x60] sm:$0xf]
  %v45 = vld [vmem:[%s1 + $0x68] sm:$0xf]
  %v46 = vld [vmem:[%s1 + $0x70] sm:$0xf]
  %v47 = vld [vmem:[%s1 + $0x78] sm:$0xf]
  %v48 = vld [vmem:[%s3] sm:$0xf]
  %v50 = vlaneseq
  %v51 = vshrl.u32 %v50, 7
  %v52 = vsub.s32 0, %v51
  %v53 = vrot.slane %v48, %v52
  %v54 = vlaneseq
  %v55 = vshrl.u32 %v54, 7
  %v56 = vsub.s32 1, %v55
  %v57 = vrot.slane %v48, %v56
  %v58 = vlaneseq
  %v59 = vshrl.u32 %v58, 7
  %v60 = vsub.s32 2, %v59
  %v61 = vrot.slane %v48, %v60
  %v62 = vlaneseq
  %v63 = vshrl.u32 %v62, 7
  %v64 = vsub.s32 3, %v63
  %v65 = vrot.slane %v48, %v64
  %vm70 = vcmask 228352
  %v72 = vsel %vm70, %v24, 0
  %v75 = vsel %vm70, %v25, 0
  %v78 = vsel %vm70, %v26, 0
  %v81 = vsel %vm70, %v27, 0
  %v84 = vsel %vm70, %v28, 0
  %v87 = vsel %vm70, %v29, 0
  %v90 = vsel %vm70, %v30, 0
  %v93 = vsel %vm70, %v31, 0
  %vm95 = vcmask 1043456
  %v97 = vsel %vm95, %v44, 0
  %v100 = vsel %vm95, %v45, 0
  %v103 = vsel %vm95, %v46, 0
  %v106 = vsel %vm95, %v47, 0
  %108 = vmatprep.subr.mxu0 %v33
  %109 = vmatpush1.msra.mxu0 %v32
  %110 = vmatprep.subr.mxu0 %v37
  %111 = vmatpush1.msra.mxu0 %v36
  %112 = vmatprep.subr.mxu0 %v41
  %113 = vmatpush1.msra.mxu0 %v40
  %114 = vmatprep.subr.mxu0 %v100
  %115 = vmatpush1.msra.mxu0 %v97
  %116 = vmatprep.subr.mxu0 0.0
  %117 = vmatpush1.msra.mxu0 0.0
  %118 = vmatprep.subr.mxu0 0.0
  %119 = vmatpush1.msra.mxu0 0.0
  %120 = vmatprep.subr.mxu0 0.0
  %121 = vmatpush1.msra.mxu0 0.0
  %122 = vmatprep.subr.mxu0 0.0
  %123 = vmatpush1.msra.mxu0 0.0
  %124 = vmatprep.subr.mxu0 0.0
  %125 = vmatpush1.msra.mxu0 0.0
  %126 = vmatprep.subr.mxu0 0.0
  %127 = vmatpush1.msra.mxu0 0.0
  %128 = vmatprep.subr.mxu0 0.0
  %129 = vmatpush1.msra.mxu0 0.0
  %130 = vmatprep.subr.mxu0 0.0
  %131 = vmatpush1.msra.mxu0 0.0
  %132 = vmatprep.subr.mxu0 0.0
  %133 = vmatpush1.msra.mxu0 0.0
  %134 = vmatprep.subr.mxu0 0.0
  %135 = vmatpush1.msra.mxu0 0.0
  %136 = vmatprep.subr.mxu0 0.0
  %137 = vmatpush1.msra.mxu0 0.0
  %138 = vmatprep.subr.mxu0 0.0
  %139 = vmatpush1.msra.mxu0 0.0
  %140 = vmatprep.subr.mxu0 0.0
  %141 = vmatpush1.msra.mxu0 0.0
  %142 = vmatprep.subr.mxu0 0.0
  %143 = vmatpush1.msra.mxu0 0.0
  %144 = vmatprep.subr.mxu0 0.0
  %145 = vmatpush1.msra.mxu0 0.0
  %146 = vmatprep.subr.mxu0 0.0
  %147 = vmatpush1.msra.mxu0 0.0
  %148 = vmatprep.subr.mxu0 0.0
  %149 = vmatpush1.msra.mxu0 0.0
  %150 = vmatprep.subr.mxu0 0.0
  %151 = vmatpush1.msra.mxu0 0.0
  %152 = vmatprep.subr.mxu0 0.0
  %153 = vmatpush1.msra.mxu0 0.0
  %154 = vmatprep.subr.mxu0 0.0
  %155 = vmatpush1.msra.mxu0 0.0
  %156 = vmatprep.subr.mxu0 0.0
  %157 = vmatpush1.msra.mxu0 0.0
  %158 = vmatprep.subr.mxu0 0.0
  %159 = vmatpush1.msra.mxu0 0.0
  %160 = vmatprep.subr.mxu0 0.0
  %161 = vmatpush1.msra.mxu0 0.0
  %162 = vmatprep.subr.mxu0 0.0
  %163 = vmatpush1.msra.mxu0 0.0
  %164 = vmatprep.subr.mxu0 0.0
  %165 = vmatpush1.msra.mxu0 0.0
  %166 = vmatprep.subr.mxu0 0.0
  %167 = vmatpush1.msra.mxu0 0.0
  %168 = vmatprep.subr.mxu0 0.0
  %169 = vmatpush1.msra.mxu0 0.0
  %170 = vmatprep.subr.mxu0 0.0
  %171 = vmatpush1.msra.mxu0 0.0
  %172 = vmatprep.mubr.f32.mxu0 0.0
  %173 = vmatmul.mubr.f32.gmra.mrb[0].mxu0 %v72
  %v174 = vpop.f32.mrb[0].mxu0
  %v175 = vadd.f32 %v53, %v174
  %v176 = vpop.f32.mrb[0].mxu0
  %v177 = vadd.f32 %v57, %v176
  %178 = vmatprep.mubr.f32.mxu0 0.0
  %179 = vmatmul.mubr.f32.gmra.mrb[0].mxu0 %v75
  %v180 = vpop.f32.mrb[0].mxu0
  %v181 = vadd.f32 %v53, %v180
  %v182 = vpop.f32.mrb[0].mxu0
  %v183 = vadd.f32 %v57, %v182
  %184 = vmatprep.mubr.f32.mxu0 0.0
  %185 = vmatmul.mubr.f32.gmra.mrb[0].mxu0 %v78
  %v186 = vpop.f32.mrb[0].mxu0
  %v187 = vadd.f32 %v53, %v186
  %v188 = vpop.f32.mrb[0].mxu0
  %v189 = vadd.f32 %v57, %v188
  %190 = vmatprep.mubr.f32.mxu0 0.0
  %191 = vmatmul.mubr.f32.gmra.mrb[0].mxu0 %v81
  %v192 = vpop.f32.mrb[0].mxu0
  %v193 = vadd.f32 %v53, %v192
  %v194 = vpop.f32.mrb[0].mxu0
  %v195 = vadd.f32 %v57, %v194
  %196 = vmatprep.mubr.f32.mxu0 0.0
  %197 = vmatmul.mubr.f32.gmra.mrb[0].mxu0 %v84
  %v198 = vpop.f32.mrb[0].mxu0
  %v199 = vadd.f32 %v53, %v198
  %v200 = vpop.f32.mrb[0].mxu0
  %v201 = vadd.f32 %v57, %v200
  %202 = vmatprep.mubr.f32.mxu0 0.0
  %203 = vmatmul.mubr.f32.gmra.mrb[0].mxu0 %v87
  %v204 = vpop.f32.mrb[0].mxu0
  %v205 = vadd.f32 %v53, %v204
  %v206 = vpop.f32.mrb[0].mxu0
  %v207 = vadd.f32 %v57, %v206
  %208 = vmatprep.mubr.f32.mxu0 0.0
  %209 = vmatmul.mubr.f32.gmra.mrb[0].mxu0 %v90
  %v210 = vpop.f32.mrb[0].mxu0
  %v211 = vadd.f32 %v53, %v210
  %v212 = vpop.f32.mrb[0].mxu0
  %v213 = vadd.f32 %v57, %v212
  %214 = vmatprep.mubr.f32.mxu0 0.0
  %215 = vmatmul.mubr.f32.gmra.mrb[0].mxu0 %v93
  %v216 = vpop.f32.mrb[0].mxu0
  %v217 = vadd.f32 %v53, %v216
  %v218 = vpop.f32.mrb[0].mxu0
  %v219 = vadd.f32 %v57, %v218
  %220 = vdwg.mxu0
  %221 = vmatprep.subr.mxu0 %v35
  %222 = vmatpush1.msra.mxu0 %v34
  %223 = vmatprep.subr.mxu0 %v39
  %224 = vmatpush1.msra.mxu0 %v38
  %225 = vmatprep.subr.mxu0 %v43
  %226 = vmatpush1.msra.mxu0 %v42
  %227 = vmatprep.subr.mxu0 %v106
  %228 = vmatpush1.msra.mxu0 %v103
  %229 = vmatprep.subr.mxu0 0.0
  %230 = vmatpush1.msra.mxu0 0.0
  %231 = vmatprep.subr.mxu0 0.0
  %232 = vmatpush1.msra.mxu0 0.0
  %233 = vmatprep.subr.mxu0 0.0
  %234 = vmatpush1.msra.mxu0 0.0
  %235 = vmatprep.subr.mxu0 0.0
  %236 = vmatpush1.msra.mxu0 0.0
  %237 = vmatprep.subr.mxu0 0.0
  %238 = vmatpush1.msra.mxu0 0.0
  %239 = vmatprep.subr.mxu0 0.0
  %240 = vmatpush1.msra.mxu0 0.0
  %241 = vmatprep.subr.mxu0 0.0
  %242 = vmatpush1.msra.mxu0 0.0
  %243 = vmatprep.subr.mxu0 0.0
  %244 = vmatpush1.msra.mxu0 0.0
  %245 = vmatprep.subr.mxu0 0.0
  %246 = vmatpush1.msra.mxu0 0.0
  %247 = vmatprep.subr.mxu0 0.0
  %248 = vmatpush1.msra.mxu0 0.0
  %249 = vmatprep.subr.mxu0 0.0
  %250 = vmatpush1.msra.mxu0 0.0
  %251 = vmatprep.subr.mxu0 0.0
  %252 = vmatpush1.msra.mxu0 0.0
  %253 = vmatprep.subr.mxu0 0.0
  %254 = vmatpush1.msra.mxu0 0.0
  %255 = vmatprep.subr.mxu0 0.0
  %256 = vmatpush1.msra.mxu0 0.0
  %257 = vmatprep.subr.mxu0 0.0
  %258 = vmatpush1.msra.mxu0 0.0
  %259 = vmatprep.subr.mxu0 0.0
  %260 = vmatpush1.msra.mxu0 0.0
  %261 = vmatprep.subr.mxu0 0.0
  %262 = vmatpush1.msra.mxu0 0.0
  %263 = vmatprep.subr.mxu0 0.0
  %264 = vmatpush1.msra.mxu0 0.0
  %265 = vmatprep.subr.mxu0 0.0
  %266 = vmatpush1.msra.mxu0 0.0
  %267 = vmatprep.subr.mxu0 0.0
  %268 = vmatpush1.msra.mxu0 0.0
  %269 = vmatprep.subr.mxu0 0.0
  %270 = vmatpush1.msra.mxu0 0.0
  %271 = vmatprep.subr.mxu0 0.0
  %272 = vmatpush1.msra.mxu0 0.0
  %273 = vmatprep.subr.mxu0 0.0
  %274 = vmatpush1.msra.mxu0 0.0
  %275 = vmatprep.subr.mxu0 0.0
  %276 = vmatpush1.msra.mxu0 0.0
  %277 = vmatprep.subr.mxu0 0.0
  %278 = vmatpush1.msra.mxu0 0.0
  %279 = vmatprep.subr.mxu0 0.0
  %280 = vmatpush1.msra.mxu0 0.0
  %281 = vmatprep.subr.mxu0 0.0
  %282 = vmatpush1.msra.mxu0 0.0
  %283 = vmatprep.subr.mxu0 0.0
  %284 = vmatpush1.msra.mxu0 0.0
  %285 = vmatprep.mubr.f32.mxu0 0.0
  %286 = vmatmul.mubr.f32.gmra.mrb[0].mxu0 %v72
  %v287 = vpop.f32.mrb[0].mxu0
  %v288 = vadd.f32 %v61, %v287
  %v289 = vpop.f32.mrb[0].mxu0
  %v290 = vadd.f32 %v65, %v289
  %291 = vmatprep.mubr.f32.mxu0 0.0
  %292 = vmatmul.mubr.f32.gmra.mrb[0].mxu0 %v75
  %v293 = vpop.f32.mrb[0].mxu0
  %v294 = vadd.f32 %v61, %v293
  %v295 = vpop.f32.mrb[0].mxu0
  %v296 = vadd.f32 %v65, %v295
  %297 = vmatprep.mubr.f32.mxu0 0.0
  %298 = vmatmul.mubr.f32.gmra.mrb[0].mxu0 %v78
  %v299 = vpop.f32.mrb[0].mxu0
  %v300 = vadd.f32 %v61, %v299
  %v301 = vpop.f32.mrb[0].mxu0
  %v302 = vadd.f32 %v65, %v301
  %303 = vmatprep.mubr.f32.mxu0 0.0
  %304 = vmatmul.mubr.f32.gmra.mrb[0].mxu0 %v81
  %v305 = vpop.f32.mrb[0].mxu0
  %v306 = vadd.f32 %v61, %v305
  %v307 = vpop.f32.mrb[0].mxu0
  %v308 = vadd.f32 %v65, %v307
  %309 = vmatprep.mubr.f32.mxu0 0.0
  %310 = vmatmul.mubr.f32.gmra.mrb[0].mxu0 %v84
  %v311 = vpop.f32.mrb[0].mxu0
  %v312 = vadd.f32 %v61, %v311
  %v313 = vpop.f32.mrb[0].mxu0
  %v314 = vadd.f32 %v65, %v313
  %315 = vmatprep.mubr.f32.mxu0 0.0
  %316 = vmatmul.mubr.f32.gmra.mrb[0].mxu0 %v87
  %v317 = vpop.f32.mrb[0].mxu0
  %v318 = vadd.f32 %v61, %v317
  %v319 = vpop.f32.mrb[0].mxu0
  %v320 = vadd.f32 %v65, %v319
  %321 = vmatprep.mubr.f32.mxu0 0.0
  %322 = vmatmul.mubr.f32.gmra.mrb[0].mxu0 %v90
  %v323 = vpop.f32.mrb[0].mxu0
  %v324 = vadd.f32 %v61, %v323
  %v325 = vpop.f32.mrb[0].mxu0
  %v326 = vadd.f32 %v65, %v325
  %327 = vmatprep.mubr.f32.mxu0 0.0
  %328 = vmatmul.mubr.f32.gmra.mrb[0].mxu0 %v93
  %v329 = vpop.f32.mrb[0].mxu0
  %v330 = vadd.f32 %v61, %v329
  %v331 = vpop.f32.mrb[0].mxu0
  %v332 = vadd.f32 %v65, %v331
  %333 = vdwg.mxu0
  %334 = vst [vmem:[#allocation2] sm:$0xff] %v175
  %335 = vst [vmem:[#allocation2 + $0x8] sm:$0xff] %v177
  %336 = vst [vmem:[#allocation2 + $0x10] sm:$0xff] %v288
  %337 = vst [vmem:[#allocation2 + $0x18] sm:$0xff] %v290
  %338 = vst [vmem:[#allocation2 + $0x20] sm:$0xff] %v181
  %339 = vst [vmem:[#allocation2 + $0x28] sm:$0xff] %v183
  %340 = vst [vmem:[#allocation2 + $0x30] sm:$0xff] %v294
  %341 = vst [vmem:[#allocation2 + $0x38] sm:$0xff] %v296
  %342 = vst [vmem:[#allocation2 + $0x40] sm:$0xff] %v187
  %343 = vst [vmem:[#allocation2 + $0x48] sm:$0xff] %v189
  %344 = vst [vmem:[#allocation2 + $0x50] sm:$0xff] %v300
  %345 = vst [vmem:[#allocation2 + $0x58] sm:$0xff] %v302
  %346 = vst [vmem:[#allocation2 + $0x60] sm:$0xff] %v193
  %347 = vst [vmem:[#allocation2 + $0x68] sm:$0xff] %v195
  %348 = vst [vmem:[#allocation2 + $0x70] sm:$0xff] %v306
  %349 = vst [vmem:[#allocation2 + $0x78] sm:$0xff] %v308
  %350 = vst [vmem:[#allocation2 + $0x80] sm:$0xff] %v199
  %351 = vst [vmem:[#allocation2 + $0x88] sm:$0xff] %v201
  %352 = vst [vmem:[#allocation2 + $0x90] sm:$0xff] %v312
  %353 = vst [vmem:[#allocation2 + $0x98] sm:$0xff] %v314
  %354 = vst [vmem:[#allocation2 + $0xa0] sm:$0xff] %v205
  %355 = vst [vmem:[#allocation2 + $0xa8] sm:$0xff] %v207
  %356 = vst [vmem:[#allocation2 + $0xb0] sm:$0xff] %v318
  %357 = vst [vmem:[#allocation2 + $0xb8] sm:$0xff] %v320
  %358 = vst [vmem:[#allocation2 + $0xc0] sm:$0xff] %v211
  %359 = vst [vmem:[#allocation2 + $0xc8] sm:$0xff] %v213
  %360 = vst [vmem:[#allocation2 + $0xd0] sm:$0xff] %v324
  %361 = vst [vmem:[#allocation2 + $0xd8] sm:$0xff] %v326
  %362 = vst [vmem:[#allocation2 + $0xe0] sm:$0xff] %v217
  %363 = vst [vmem:[#allocation2 + $0xe8] sm:$0xff] %v219
  %364 = vst [vmem:[#allocation2 + $0xf0] sm:$0xff] %v330
  %365 = vst [vmem:[#allocation2 + $0xf8] sm:$0xff] %v332
  %v366 = vld [vmem:[%s2] sm:$0xff]
  %v367 = vld [vmem:[%s2 + $0x8] sm:$0xff]
  %v368 = vld [vmem:[%s2 + $0x10] sm:$0xff]
  %v369 = vld [vmem:[%s2 + $0x18] sm:$0xff]
  %v370 = vld [vmem:[%s2 + $0x20] sm:$0xff]
  %v371 = vld [vmem:[%s2 + $0x28] sm:$0xff]
  %v372 = vld [vmem:[%s2 + $0x30] sm:$0xff]
  %v373 = vld [vmem:[%s2 + $0x38] sm:$0xff]
  %v374 = vld [vmem:[%s2 + $0x40] sm:$0xff]
  %v375 = vld [vmem:[%s2 + $0x48] sm:$0xff]
  %v376 = vld [vmem:[%s2 + $0x50] sm:$0xff]
  %v377 = vld [vmem:[%s2 + $0x58] sm:$0xff]
  %v378 = vld [vmem:[%s2 + $0x60] sm:$0xff]
  %v379 = vld [vmem:[%s2 + $0x68] sm:$0xff]
  %v380 = vld [vmem:[%s2 + $0x70] sm:$0xff]
  %v381 = vld [vmem:[%s2 + $0x78] sm:$0xff]
  %v382 = vld [vmem:[%s2 + $0x80] sm:$0xff]
  %v383 = vld [vmem:[%s2 + $0x88] sm:$0xff]
  %v384 = vld [vmem:[%s2 + $0x90] sm:$0xff]
  %v385 = vld [vmem:[%s2 + $0x98] sm:$0xff]
  %v386 = vld [vmem:[%s2 + $0xa0] sm:$0xff]
  %v387 = vld [vmem:[%s2 + $0xa8] sm:$0xff]
  %v388 = vld [vmem:[%s2 + $0xb0] sm:$0xff]
  %v389 = vld [vmem:[%s2 + $0xb8] sm:$0xff]
  %v390 = vld [vmem:[%s2 + $0xc0] sm:$0xff]
  %v391 = vld [vmem:[%s2 + $0xc8] sm:$0xff]
  %v392 = vld [vmem:[%s2 + $0xd0] sm:$0xff]
  %v393 = vld [vmem:[%s2 + $0xd8] sm:$0xff]
  %v394 = vld [vmem:[%s2 + $0xe0] sm:$0xff]
  %v395 = vld [vmem:[%s2 + $0xe8] sm:$0xff]
  %v396 = vld [vmem:[%s2 + $0xf0] sm:$0xff]
  %v397 = vld [vmem:[%s2 + $0xf8] sm:$0xff]
  %v430 = vunpack.c.l.b16 %v366
  %v431 = vunpack.c.h.b16 %v366
  %v432 = vunpack.c.l.b16 %v367
  %v433 = vunpack.c.h.b16 %v367
  %v434 = vunpack.c.l.b16 %v368
  %v435 = vunpack.c.h.b16 %v368
  %v436 = vunpack.c.l.b16 %v369
  %v437 = vunpack.c.h.b16 %v369
  %v438 = vunpack.c.l.b16 %v370
  %v439 = vunpack.c.h.b16 %v370
  %v440 = vunpack.c.l.b16 %v371
  %v441 = vunpack.c.h.b16 %v371
  %v442 = vunpack.c.l.b16 %v372
  %v443 = vunpack.c.h.b16 %v372
  %v444 = vunpack.c.l.b16 %v373
  %v445 = vunpack.c.h.b16 %v373
  %v446 = vunpack.c.l.b16 %v374
  %v447 = vunpack.c.h.b16 %v374
  %v448 = vunpack.c.l.b16 %v375
  %v449 = vunpack.c.h.b16 %v375
  %v450 = vunpack.c.l.b16 %v376
  %v451 = vunpack.c.h.b16 %v376
  %v452 = vunpack.c.l.b16 %v377
  %v453 = vunpack.c.h.b16 %v377
  %v454 = vunpack.c.l.b16 %v378
  %v455 = vunpack.c.h.b16 %v378
  %v456 = vunpack.c.l.b16 %v379
  %v457 = vunpack.c.h.b16 %v379
  %v458 = vunpack.c.l.b16 %v380
  %v459 = vunpack.c.h.b16 %v380
  %v460 = vunpack.c.l.b16 %v381
  %v461 = vunpack.c.h.b16 %v381
  %v462 = vunpack.c.l.b16 %v382
  %v463 = vunpack.c.h.b16 %v382
  %v464 = vunpack.c.l.b16 %v383
  %v465 = vunpack.c.h.b16 %v383
  %v466 = vunpack.c.l.b16 %v384
  %v467 = vunpack.c.h.b16 %v384
  %v468 = vunpack.c.l.b16 %v385
  %v469 = vunpack.c.h.b16 %v385
  %v470 = vunpack.c.l.b16 %v386
  %v471 = vunpack.c.h.b16 %v386
  %v472 = vunpack.c.l.b16 %v387
  %v473 = vunpack.c.h.b16 %v387
  %v474 = vunpack.c.l.b16 %v388
  %v475 = vunpack.c.h.b16 %v388
  %v476 = vunpack.c.l.b16 %v389
  %v477 = vunpack.c.h.b16 %v389
  %v478 = vunpack.c.l.b16 %v390
  %v479 = vunpack.c.h.b16 %v390
  %v480 = vunpack.c.l.b16 %v391
  %v481 = vunpack.c.h.b16 %v391
  %v482 = vunpack.c.l.b16 %v392
  %v483 = vunpack.c.h.b16 %v392
  %v484 = vunpack.c.l.b16 %v393
  %v485 = vunpack.c.h.b16 %v393
  %v486 = vunpack.c.l.b16 %v394
  %v487 = vunpack.c.h.b16 %v394
  %v488 = vunpack.c.l.b16 %v395
  %v489 = vunpack.c.h.b16 %v395
  %v490 = vunpack.c.l.b16 %v396
  %v491 = vunpack.c.h.b16 %v396
  %v492 = vunpack.c.l.b16 %v397
  %v493 = vunpack.c.h.b16 %v397
  %v494 = vpack.c.b16 %v434, %v430
  %v495 = vpack.c.b16 %v435, %v431
  %v496 = vpack.c.b16 %v436, %v432
  %v497 = vpack.c.b16 %v437, %v433
  %v498 = vpack.c.b16 %v442, %v438
  %v499 = vpack.c.b16 %v443, %v439
  %v500 = vpack.c.b16 %v444, %v440
  %v501 = vpack.c.b16 %v445, %v441
  %v502 = vpack.c.b16 %v450, %v446
  %v503 = vpack.c.b16 %v451, %v447
  %v504 = vpack.c.b16 %v452, %v448
  %v505 = vpack.c.b16 %v453, %v449
  %v506 = vpack.c.b16 %v458, %v454
  %v507 = vpack.c.b16 %v459, %v455
  %v508 = vpack.c.b16 %v460, %v456
  %v509 = vpack.c.b16 %v461, %v457
  %v510 = vpack.c.b16 %v466, %v462
  %v511 = vpack.c.b16 %v467, %v463
  %v512 = vpack.c.b16 %v468, %v464
  %v513 = vpack.c.b16 %v469, %v465
  %v514 = vpack.c.b16 %v474, %v470
  %v515 = vpack.c.b16 %v475, %v471
  %v516 = vpack.c.b16 %v476, %v472
  %v517 = vpack.c.b16 %v477, %v473
  %v518 = vpack.c.b16 %v482, %v478
  %v519 = vpack.c.b16 %v483, %v479
  %v520 = vpack.c.b16 %v484, %v480
  %v521 = vpack.c.b16 %v485, %v481
  %v522 = vpack.c.b16 %v490, %v486
  %v523 = vpack.c.b16 %v491, %v487
  %v524 = vpack.c.b16 %v492, %v488
  %v525 = vpack.c.b16 %v493, %v489
  %558 = vmatprep.subr.bf16.mxu0 %v495
  %559 = vmatpush1.bf16.msra.mxu0 %v494
  %560 = vmatprep.subr.bf16.mxu0 %v499
  %561 = vmatpush1.bf16.msra.mxu0 %v498
  %562 = vmatprep.subr.bf16.mxu0 %v503
  %563 = vmatpush1.bf16.msra.mxu0 %v502
  %564 = vmatprep.subr.bf16.mxu0 %v507
  %565 = vmatpush1.bf16.msra.mxu0 %v506
  %566 = vmatprep.subr.bf16.mxu0 %v511
  %567 = vmatpush1.bf16.msra.mxu0 %v510
  %568 = vmatprep.subr.bf16.mxu0 %v515
  %569 = vmatpush1.bf16.msra.mxu0 %v514
  %570 = vmatprep.subr.bf16.mxu0 %v519
  %571 = vmatpush1.bf16.msra.mxu0 %v518
  %572 = vmatprep.subr.bf16.mxu0 %v523
  %573 = vmatpush1.bf16.msra.mxu0 %v522
  %574 = vmatprep.subr.bf16.mxu0 0
  %575 = vmatpush1.bf16.msra.mxu0 0
  %576 = vmatprep.subr.bf16.mxu0 0
  %577 = vmatpush1.bf16.msra.mxu0 0
  %578 = vmatprep.subr.bf16.mxu0 0
  %579 = vmatpush1.bf16.msra.mxu0 0
  %580 = vmatprep.subr.bf16.mxu0 0
  %581 = vmatpush1.bf16.msra.mxu0 0
  %582 = vmatprep.subr.bf16.mxu0 0
  %583 = vmatpush1.bf16.msra.mxu0 0
  %584 = vmatprep.subr.bf16.mxu0 0
  %585 = vmatpush1.bf16.msra.mxu0 0
  %586 = vmatprep.subr.bf16.mxu0 0
  %587 = vmatpush1.bf16.msra.mxu0 0
  %588 = vmatprep.subr.bf16.mxu0 0
  %589 = vmatpush1.bf16.msra.mxu0 0
  %590 = vmatprep.mubr.bf16.mxu0 0
  %591 = vmatmul.mubr.bf16.gmra.mrb[0].mxu0 0
  %v592 = vpop.f32.mrb[0].mxu0
  %v593 = vadd.f32 0.0, %v592
  %v594 = vpop.f32.mrb[0].mxu0
  %v595 = vadd.f32 0.0, %v594
  %v596 = vpop.f32.mrb[0].mxu0
  %v597 = vpop.f32.mrb[0].mxu0
  %598 = vdwg.mxu0
  %599 = vmatprep.subr.bf16.mxu0 %v497
  %600 = vmatpush1.bf16.msra.mxu0 %v496
  %601 = vmatprep.subr.bf16.mxu0 %v501
  %602 = vmatpush1.bf16.msra.mxu0 %v500
  %603 = vmatprep.subr.bf16.mxu0 %v505
  %604 = vmatpush1.bf16.msra.mxu0 %v504
  %605 = vmatprep.subr.bf16.mxu0 %v509
  %606 = vmatpush1.bf16.msra.mxu0 %v508
  %607 = vmatprep.subr.bf16.mxu0 %v513
  %608 = vmatpush1.bf16.msra.mxu0 %v512
  %609 = vmatprep.subr.bf16.mxu0 %v517
  %610 = vmatpush1.bf16.msra.mxu0 %v516
  %611 = vmatprep.subr.bf16.mxu0 %v521
  %612 = vmatpush1.bf16.msra.mxu0 %v520
  %613 = vmatprep.subr.bf16.mxu0 %v525
  %614 = vmatpush1.bf16.msra.mxu0 %v524
  %615 = vmatprep.subr.bf16.mxu0 0
  %616 = vmatpush1.bf16.msra.mxu0 0
  %617 = vmatprep.subr.bf16.mxu0 0
  %618 = vmatpush1.bf16.msra.mxu0 0
  %619 = vmatprep.subr.bf16.mxu0 0
  %620 = vmatpush1.bf16.msra.mxu0 0
  %621 = vmatprep.subr.bf16.mxu0 0
  %622 = vmatpush1.bf16.msra.mxu0 0
  %623 = vmatprep.subr.bf16.mxu0 0
  %624 = vmatpush1.bf16.msra.mxu0 0
  %625 = vmatprep.subr.bf16.mxu0 0
  %626 = vmatpush1.bf16.msra.mxu0 0
  %627 = vmatprep.subr.bf16.mxu0 0
  %628 = vmatpush1.bf16.msra.mxu0 0
  %629 = vmatprep.subr.bf16.mxu0 0
  %630 = vmatpush1.bf16.msra.mxu0 0
  %631 = vmatprep.mubr.bf16.mxu0 0
  %632 = vmatmul.mubr.bf16.gmra.mrb[0].mxu0 0
  %v633 = vpop.f32.mrb[0].mxu0
  %v634 = vadd.f32 0.0, %v633
  %v635 = vpop.f32.mrb[0].mxu0
  %v636 = vadd.f32 0.0, %v635
  %v637 = vpop.f32.mrb[0].mxu0
  %v638 = vpop.f32.mrb[0].mxu0
  %639 = vdwg.mxu0
  %v640 = vld [vmem:[#allocation2] sm:$0xff]
  %v641 = vld [vmem:[#allocation2 + $0x8] sm:$0xff]
  %v642 = vld [vmem:[#allocation2 + $0x10] sm:$0xff]
  %v643 = vld [vmem:[#allocation2 + $0x18] sm:$0xff]
  %v644 = vadd.f32 %v640, %v593
  %v645 = vadd.f32 %v641, %v595
  %v646 = vadd.f32 %v642, %v634
  %v647 = vadd.f32 %v643, %v636
  %v648 = vtanh.pop %v644
  %v649 = vtanh.pop %v645
  %v650 = vtanh.pop %v646
  %v651 = vtanh.pop %v647
  %v652 = vmul.f32 %v648, 0.5
  %v653 = vadd.f32 %v652, 0.5
  %v654 = vmul.f32 %v649, 0.5
  %v655 = vadd.f32 %v654, 0.5
  %v656 = vmul.f32 %v651, 0.5
  %v657 = vadd.f32 %v656, 0.5
  %v658 = vmul.f32 %v655, 0.0
  %v659 = vmul.f32 %v653, %v650
  %v660 = vadd.f32 %v658, %v659
  %v661 = vtanh.pop %v660
  %v662 = vmul.f32 %v657, %v661
  %v663 = vpack.c.bf16 %v662, %v662
  %664 = vmatprep.subr.bf16.mxu0 %v495
  %665 = vmatpush1.bf16.msra.mxu0 %v494
  %666 = vmatprep.subr.bf16.mxu0 %v499
  %667 = vmatpush1.bf16.msra.mxu0 %v498
  %668 = vmatprep.subr.bf16.mxu0 %v503
  %669 = vmatpush1.bf16.msra.mxu0 %v502
  %670 = vmatprep.subr.bf16.mxu0 %v507
  %671 = vmatpush1.bf16.msra.mxu0 %v506
  %672 = vmatprep.subr.bf16.mxu0 %v511
  %673 = vmatpush1.bf16.msra.mxu0 %v510
  %674 = vmatprep.subr.bf16.mxu0 %v515
  %675 = vmatpush1.bf16.msra.mxu0 %v514
  %676 = vmatprep.subr.bf16.mxu0 %v519
  %677 = vmatpush1.bf16.msra.mxu0 %v518
  %678 = vmatprep.subr.bf16.mxu0 %v523
  %679 = vmatpush1.bf16.msra.mxu0 %v522
  %680 = vmatprep.subr.bf16.mxu0 0
  %681 = vmatpush1.bf16.msra.mxu0 0
  %682 = vmatprep.subr.bf16.mxu0 0
  %683 = vmatpush1.bf16.msra.mxu0 0
  %684 = vmatprep.subr.bf16.mxu0 0
  %685 = vmatpush1.bf16.msra.mxu0 0
  %686 = vmatprep.subr.bf16.mxu0 0
  %687 = vmatpush1.bf16.msra.mxu0 0
  %688 = vmatprep.subr.bf16.mxu0 0
  %689 = vmatpush1.bf16.msra.mxu0 0
  %690 = vmatprep.subr.bf16.mxu0 0
  %691 = vmatpush1.bf16.msra.mxu0 0
  %692 = vmatprep.subr.bf16.mxu0 0
  %693 = vmatpush1.bf16.msra.mxu0 0
  %694 = vmatprep.subr.bf16.mxu0 0
  %695 = vmatpush1.bf16.msra.mxu0 0
  %696 = vmatprep.mubr.bf16.mxu0 0
  %697 = vmatmul.mubr.bf16.gmra.mrb[0].mxu0 %v663
  %v698 = vpop.f32.mrb[0].mxu0
  %v699 = vadd.f32 0.0, %v698
  %v700 = vpop.f32.mrb[0].mxu0
  %v701 = vadd.f32 0.0, %v700
  %v702 = vpop.f32.mrb[0].mxu0
  %v703 = vpop.f32.mrb[0].mxu0
  %704 = vdwg.mxu0
  %705 = vmatprep.subr.bf16.mxu0 %v497
  %706 = vmatpush1.bf16.msra.mxu0 %v496
  %707 = vmatprep.subr.bf16.mxu0 %v501
  %708 = vmatpush1.bf16.msra.mxu0 %v500
  %709 = vmatprep.subr.bf16.mxu0 %v505
  %710 = vmatpush1.bf16.msra.mxu0 %v504
  %711 = vmatprep.subr.bf16.mxu0 %v509
  %712 = vmatpush1.bf16.msra.mxu0 %v508
  %713 = vmatprep.subr.bf16.mxu0 %v513
  %714 = vmatpush1.bf16.msra.mxu0 %v512
  %715 = vmatprep.subr.bf16.mxu0 %v517
  %716 = vmatpush1.bf16.msra.mxu0 %v516
  %717 = vmatprep.subr.bf16.mxu0 %v521
  %718 = vmatpush1.bf16.msra.mxu0 %v520
  %719 = vmatprep.subr.bf16.mxu0 %v525
  %720 = vmatpush1.bf16.msra.mxu0 %v524
  %721 = vmatprep.subr.bf16.mxu0 0
  %722 = vmatpush1.bf16.msra.mxu0 0
  %723 = vmatprep.subr.bf16.mxu0 0
  %724 = vmatpush1.bf16.msra.mxu0 0
  %725 = vmatprep.subr.bf16.mxu0 0
  %726 = vmatpush1.bf16.msra.mxu0 0
  %727 = vmatprep.subr.bf16.mxu0 0
  %728 = vmatpush1.bf16.msra.mxu0 0
  %729 = vmatprep.subr.bf16.mxu0 0
  %730 = vmatpush1.bf16.msra.mxu0 0
  %731 = vmatprep.subr.bf16.mxu0 0
  %732 = vmatpush1.bf16.msra.mxu0 0
  %733 = vmatprep.subr.bf16.mxu0 0
  %734 = vmatpush1.bf16.msra.mxu0 0
  %735 = vmatprep.subr.bf16.mxu0 0
  %736 = vmatpush1.bf16.msra.mxu0 0
  %737 = vmatprep.mubr.bf16.mxu0 0
  %738 = vmatmul.mubr.bf16.gmra.mrb[0].mxu0 %v663
  %v739 = vpop.f32.mrb[0].mxu0
  %v740 = vadd.f32 0.0, %v739
  %v741 = vpop.f32.mrb[0].mxu0
  %v742 = vadd.f32 0.0, %v741
  %v743 = vpop.f32.mrb[0].mxu0
  %v744 = vpop.f32.mrb[0].mxu0
  %745 = vdwg.mxu0
  %v746 = vld [vmem:[#allocation2 + $0x20] sm:$0xff]
  %v747 = vld [vmem:[#allocation2 + $0x28] sm:$0xff]
  %v748 = vld [vmem:[#allocation2 + $0x30] sm:$0xff]
  %v749 = vld [vmem:[#allocation2 + $0x38] sm:$0xff]
  %v750 = vadd.f32 %v746, %v699
  %v751 = vadd.f32 %v747, %v701
  %v752 = vadd.f32 %v748, %v740
  %v753 = vadd.f32 %v749, %v742
  %v754 = vtanh.pop %v750
  %v755 = vtanh.pop %v751
  %v756 = vtanh.pop %v752
  %v757 = vtanh.pop %v753
  %v758 = vmul.f32 %v754, 0.5
  %v759 = vadd.f32 %v758, 0.5
  %v760 = vmul.f32 %v755, 0.5
  %v761 = vadd.f32 %v760, 0.5
  %v762 = vmul.f32 %v757, 0.5
  %v763 = vadd.f32 %v762, 0.5
  %v764 = vmul.f32 %v761, %v660
  %v765 = vmul.f32 %v759, %v756
  %v766 = vadd.f32 %v764, %v765
  %v767 = vtanh.pop %v766
  %v768 = vmul.f32 %v763, %v767
  %v769 = vpack.c.bf16 %v768, %v768
  %770 = vmatprep.subr.bf16.mxu0 %v495
  %771 = vmatpush1.bf16.msra.mxu0 %v494
  %772 = vmatprep.subr.bf16.mxu0 %v499
  %773 = vmatpush1.bf16.msra.mxu0 %v498
  %774 = vmatprep.subr.bf16.mxu0 %v503
  %775 = vmatpush1.bf16.msra.mxu0 %v502
  %776 = vmatprep.subr.bf16.mxu0 %v507
  %777 = vmatpush1.bf16.msra.mxu0 %v506
  %778 = vmatprep.subr.bf16.mxu0 %v511
  %779 = vmatpush1.bf16.msra.mxu0 %v510
  %780 = vmatprep.subr.bf16.mxu0 %v515
  %781 = vmatpush1.bf16.msra.mxu0 %v514
  %782 = vmatprep.subr.bf16.mxu0 %v519
  %783 = vmatpush1.bf16.msra.mxu0 %v518
  %784 = vmatprep.subr.bf16.mxu0 %v523
  %785 = vmatpush1.bf16.msra.mxu0 %v522
  %786 = vmatprep.subr.bf16.mxu0 0
  %787 = vmatpush1.bf16.msra.mxu0 0
  %788 = vmatprep.subr.bf16.mxu0 0
  %789 = vmatpush1.bf16.msra.mxu0 0
  %790 = vmatprep.subr.bf16.mxu0 0
  %791 = vmatpush1.bf16.msra.mxu0 0
  %792 = vmatprep.subr.bf16.mxu0 0
  %793 = vmatpush1.bf16.msra.mxu0 0
  %794 = vmatprep.subr.bf16.mxu0 0
  %795 = vmatpush1.bf16.msra.mxu0 0
  %796 = vmatprep.subr.bf16.mxu0 0
  %797 = vmatpush1.bf16.msra.mxu0 0
  %798 = vmatprep.subr.bf16.mxu0 0
  %799 = vmatpush1.bf16.msra.mxu0 0
  %800 = vmatprep.subr.bf16.mxu0 0
  %801 = vmatpush1.bf16.msra.mxu0 0
  %802 = vmatprep.mubr.bf16.mxu0 0
  %803 = vmatmul.mubr.bf16.gmra.mrb[0].mxu0 %v769
  %v804 = vpop.f32.mrb[0].mxu0
  %v805 = vadd.f32 0.0, %v804
  %v806 = vpop.f32.mrb[0].mxu0
  %v807 = vadd.f32 0.0, %v806
  %v808 = vpop.f32.mrb[0].mxu0
  %v809 = vpop.f32.mrb[0].mxu0
  %810 = vdwg.mxu0
  %811 = vmatprep.subr.bf16.mxu0 %v497
  %812 = vmatpush1.bf16.msra.mxu0 %v496
  %813 = vmatprep.subr.bf16.mxu0 %v501
  %814 = vmatpush1.bf16.msra.mxu0 %v500
  %815 = vmatprep.subr.bf16.mxu0 %v505
  %816 = vmatpush1.bf16.msra.mxu0 %v504
  %817 = vmatprep.subr.bf16.mxu0 %v509
  %818 = vmatpush1.bf16.msra.mxu0 %v508
  %819 = vmatprep.subr.bf16.mxu0 %v513
  %820 = vmatpush1.bf16.msra.mxu0 %v512
  %821 = vmatprep.subr.bf16.mxu0 %v517
  %822 = vmatpush1.bf16.msra.mxu0 %v516
  %823 = vmatprep.subr.bf16.mxu0 %v521
  %824 = vmatpush1.bf16.msra.mxu0 %v520
  %825 = vmatprep.subr.bf16.mxu0 %v525
  %826 = vmatpush1.bf16.msra.mxu0 %v524
  %827 = vmatprep.subr.bf16.mxu0 0
  %828 = vmatpush1.bf16.msra.mxu0 0
  %829 = vmatprep.subr.bf16.mxu0 0
  %830 = vmatpush1.bf16.msra.mxu0 0
  %831 = vmatprep.subr.bf16.mxu0 0
  %832 = vmatpush1.bf16.msra.mxu0 0
  %833 = vmatprep.subr.bf16.mxu0 0
  %834 = vmatpush1.bf16.msra.mxu0 0
  %835 = vmatprep.subr.bf16.mxu0 0
  %836 = vmatpush1.bf16.msra.mxu0 0
  %837 = vmatprep.subr.bf16.mxu0 0
  %838 = vmatpush1.bf16.msra.mxu0 0
  %839 = vmatprep.subr.bf16.mxu0 0
  %840 = vmatpush1.bf16.msra.mxu0 0
  %841 = vmatprep.subr.bf16.mxu0 0
  %842 = vmatpush1.bf16.msra.mxu0 0
  %843 = vmatprep.mubr.bf16.mxu0 0
  %844 = vmatmul.mubr.bf16.gmra.mrb[0].mxu0 %v769
  %v845 = vpop.f32.mrb[0].mxu0
  %v846 = vadd.f32 0.0, %v845
  %v847 = vpop.f32.mrb[0].mxu0
  %v848 = vadd.f32 0.0, %v847
  %v849 = vpop.f32.mrb[0].mxu0
  %v850 = vpop.f32.mrb[0].mxu0
  %851 = vdwg.mxu0
  %v852 = vld [vmem:[#allocation2 + $0x40] sm:$0xff]
  %v853 = vld [vmem:[#allocation2 + $0x48] sm:$0xff]
  %v854 = vld [vmem:[#allocation2 + $0x50] sm:$0xff]
  %v855 = vld [vmem:[#allocation2 + $0x58] sm:$0xff]
  %v856 = vadd.f32 %v852, %v805
  %v857 = vadd.f32 %v853, %v807
  %v858 = vadd.f32 %v854, %v846
  %v859 = vadd.f32 %v855, %v848
  %v860 = vtanh.pop %v856
  %v861 = vtanh.pop %v857
  %v862 = vtanh.pop %v858
  %v863 = vtanh.pop %v859
  %v864 = vmul.f32 %v860, 0.5
  %v865 = vadd.f32 %v864, 0.5
  %v866 = vmul.f32 %v861, 0.5
  %v867 = vadd.f32 %v866, 0.5
  %v868 = vmul.f32 %v863, 0.5
  %v869 = vadd.f32 %v868, 0.5
  %v870 = vmul.f32 %v867, %v766
  %v871 = vmul.f32 %v865, %v862
  %v872 = vadd.f32 %v870, %v871
  %v873 = vtanh.pop %v872
  %v874 = vmul.f32 %v869, %v873
  %v875 = vpack.c.bf16 %v874, %v874
  %876 = vmatprep.subr.bf16.mxu0 %v495
  %877 = vmatpush1.bf16.msra.mxu0 %v494
  %878 = vmatprep.subr.bf16.mxu0 %v499
  %879 = vmatpush1.bf16.msra.mxu0 %v498
  %880 = vmatprep.subr.bf16.mxu0 %v503
  %881 = vmatpush1.bf16.msra.mxu0 %v502
  %882 = vmatprep.subr.bf16.mxu0 %v507
  %883 = vmatpush1.bf16.msra.mxu0 %v506
  %884 = vmatprep.subr.bf16.mxu0 %v511
  %885 = vmatpush1.bf16.msra.mxu0 %v510
  %886 = vmatprep.subr.bf16.mxu0 %v515
  %887 = vmatpush1.bf16.msra.mxu0 %v514
  %888 = vmatprep.subr.bf16.mxu0 %v519
  %889 = vmatpush1.bf16.msra.mxu0 %v518
  %890 = vmatprep.subr.bf16.mxu0 %v523
  %891 = vmatpush1.bf16.msra.mxu0 %v522
  %892 = vmatprep.subr.bf16.mxu0 0
  %893 = vmatpush1.bf16.msra.mxu0 0
  %894 = vmatprep.subr.bf16.mxu0 0
  %895 = vmatpush1.bf16.msra.mxu0 0
  %896 = vmatprep.subr.bf16.mxu0 0
  %897 = vmatpush1.bf16.msra.mxu0 0
  %898 = vmatprep.subr.bf16.mxu0 0
  %899 = vmatpush1.bf16.msra.mxu0 0
  %900 = vmatprep.subr.bf16.mxu0 0
  %901 = vmatpush1.bf16.msra.mxu0 0
  %902 = vmatprep.subr.bf16.mxu0 0
  %903 = vmatpush1.bf16.msra.mxu0 0
  %904 = vmatprep.subr.bf16.mxu0 0
  %905 = vmatpush1.bf16.msra.mxu0 0
  %906 = vmatprep.subr.bf16.mxu0 0
  %907 = vmatpush1.bf16.msra.mxu0 0
  %908 = vmatprep.mubr.bf16.mxu0 0
  %909 = vmatmul.mubr.bf16.gmra.mrb[0].mxu0 %v875
  %v910 = vpop.f32.mrb[0].mxu0
  %v911 = vadd.f32 0.0, %v910
  %v912 = vpop.f32.mrb[0].mxu0
  %v913 = vadd.f32 0.0, %v912
  %v914 = vpop.f32.mrb[0].mxu0
  %v915 = vpop.f32.mrb[0].mxu0
  %916 = vdwg.mxu0
  %917 = vmatprep.subr.bf16.mxu0 %v497
  %918 = vmatpush1.bf16.msra.mxu0 %v496
  %919 = vmatprep.subr.bf16.mxu0 %v501
  %920 = vmatpush1.bf16.msra.mxu0 %v500
  %921 = vmatprep.subr.bf16.mxu0 %v505
  %922 = vmatpush1.bf16.msra.mxu0 %v504
  %923 = vmatprep.subr.bf16.mxu0 %v509
  %924 = vmatpush1.bf16.msra.mxu0 %v508
  %925 = vmatprep.subr.bf16.mxu0 %v513
  %926 = vmatpush1.bf16.msra.mxu0 %v512
  %927 = vmatprep.subr.bf16.mxu0 %v517
  %928 = vmatpush1.bf16.msra.mxu0 %v516
  %929 = vmatprep.subr.bf16.mxu0 %v521
  %930 = vmatpush1.bf16.msra.mxu0 %v520
  %931 = vmatprep.subr.bf16.mxu0 %v525
  %932 = vmatpush1.bf16.msra.mxu0 %v524
  %933 = vmatprep.subr.bf16.mxu0 0
  %934 = vmatpush1.bf16.msra.mxu0 0
  %935 = vmatprep.subr.bf16.mxu0 0
  %936 = vmatpush1.bf16.msra.mxu0 0
  %937 = vmatprep.subr.bf16.mxu0 0
  %938 = vmatpush1.bf16.msra.mxu0 0
  %939 = vmatprep.subr.bf16.mxu0 0
  %940 = vmatpush1.bf16.msra.mxu0 0
  %941 = vmatprep.subr.bf16.mxu0 0
  %942 = vmatpush1.bf16.msra.mxu0 0
  %943 = vmatprep.subr.bf16.mxu0 0
  %944 = vmatpush1.bf16.msra.mxu0 0
  %945 = vmatprep.subr.bf16.mxu0 0
  %946 = vmatpush1.bf16.msra.mxu0 0
  %947 = vmatprep.subr.bf16.mxu0 0
  %948 = vmatpush1.bf16.msra.mxu0 0
  %949 = vmatprep.mubr.bf16.mxu0 0
  %950 = vmatmul.mubr.bf16.gmra.mrb[0].mxu0 %v875
  %v951 = vpop.f32.mrb[0].mxu0
  %v952 = vadd.f32 0.0, %v951
  %v953 = vpop.f32.mrb[0].mxu0
  %v954 = vadd.f32 0.0, %v953
  %v955 = vpop.f32.mrb[0].mxu0
  %v956 = vpop.f32.mrb[0].mxu0
  %957 = vdwg.mxu0
  %v958 = vld [vmem:[#allocation2 + $0x60] sm:$0xff]
  %v959 = vld [vmem:[#allocation2 + $0x68] sm:$0xff]
  %v960 = vld [vmem:[#allocation2 + $0x70] sm:$0xff]
  %v961 = vld [vmem:[#allocation2 + $0x78] sm:$0xff]
  %v962 = vadd.f32 %v958, %v911
  %v963 = vadd.f32 %v959, %v913
  %v964 = vadd.f32 %v960, %v952
  %v965 = vadd.f32 %v961, %v954
  %v966 = vtanh.pop %v962
  %v967 = vtanh.pop %v963
  %v968 = vtanh.pop %v964
  %v969 = vtanh.pop %v965
  %v970 = vmul.f32 %v966, 0.5
  %v971 = vadd.f32 %v970, 0.5
  %v972 = vmul.f32 %v967, 0.5
  %v973 = vadd.f32 %v972, 0.5
  %v974 = vmul.f32 %v969, 0.5
  %v975 = vadd.f32 %v974, 0.5
  %v976 = vmul.f32 %v973, %v872
  %v977 = vmul.f32 %v971, %v968
  %v978 = vadd.f32 %v976, %v977
  %v979 = vtanh.pop %v978
  %v980 = vmul.f32 %v975, %v979
  %v981 = vpack.c.bf16 %v980, %v980
  %982 = vmatprep.subr.bf16.mxu0 %v495
  %983 = vmatpush1.bf16.msra.mxu0 %v494
  %984 = vmatprep.subr.bf16.mxu0 %v499
  %985 = vmatpush1.bf16.msra.mxu0 %v498
  %986 = vmatprep.subr.bf16.mxu0 %v503
  %987 = vmatpush1.bf16.msra.mxu0 %v502
  %988 = vmatprep.subr.bf16.mxu0 %v507
  %989 = vmatpush1.bf16.msra.mxu0 %v506
  %990 = vmatprep.subr.bf16.mxu0 %v511
  %991 = vmatpush1.bf16.msra.mxu0 %v510
  %992 = vmatprep.subr.bf16.mxu0 %v515
  %993 = vmatpush1.bf16.msra.mxu0 %v514
  %994 = vmatprep.subr.bf16.mxu0 %v519
  %995 = vmatpush1.bf16.msra.mxu0 %v518
  %996 = vmatprep.subr.bf16.mxu0 %v523
  %997 = vmatpush1.bf16.msra.mxu0 %v522
  %998 = vmatprep.subr.bf16.mxu0 0
  %999 = vmatpush1.bf16.msra.mxu0 0
  %1000 = vmatprep.subr.bf16.mxu0 0
  %1001 = vmatpush1.bf16.msra.mxu0 0
  %1002 = vmatprep.subr.bf16.mxu0 0
  %1003 = vmatpush1.bf16.msra.mxu0 0
  %1004 = vmatprep.subr.bf16.mxu0 0
  %1005 = vmatpush1.bf16.msra.mxu0 0
  %1006 = vmatprep.subr.bf16.mxu0 0
  %1007 = vmatpush1.bf16.msra.mxu0 0
  %1008 = vmatprep.subr.bf16.mxu0 0
  %1009 = vmatpush1.bf16.msra.mxu0 0
  %1010 = vmatprep.subr.bf16.mxu0 0
  %1011 = vmatpush1.bf16.msra.mxu0 0
  %1012 = vmatprep.subr.bf16.mxu0 0
  %1013 = vmatpush1.bf16.msra.mxu0 0
  %1014 = vmatprep.mubr.bf16.mxu0 0
  %1015 = vmatmul.mubr.bf16.gmra.mrb[0].mxu0 %v981
  %v1016 = vpop.f32.mrb[0].mxu0
  %v1017 = vadd.f32 0.0, %v1016
  %v1018 = vpop.f32.mrb[0].mxu0
  %v1019 = vadd.f32 0.0, %v1018
  %v1020 = vpop.f32.mrb[0].mxu0
  %v1021 = vpop.f32.mrb[0].mxu0
  %1022 = vdwg.mxu0
  %1023 = vmatprep.subr.bf16.mxu0 %v497
  %1024 = vmatpush1.bf16.msra.mxu0 %v496
  %1025 = vmatprep.subr.bf16.mxu0 %v501
  %1026 = vmatpush1.bf16.msra.mxu0 %v500
  %1027 = vmatprep.subr.bf16.mxu0 %v505
  %1028 = vmatpush1.bf16.msra.mxu0 %v504
  %1029 = vmatprep.subr.bf16.mxu0 %v509
  %1030 = vmatpush1.bf16.msra.mxu0 %v508
  %1031 = vmatprep.subr.bf16.mxu0 %v513
  %1032 = vmatpush1.bf16.msra.mxu0 %v512
  %1033 = vmatprep.subr.bf16.mxu0 %v517
  %1034 = vmatpush1.bf16.msra.mxu0 %v516
  %1035 = vmatprep.subr.bf16.mxu0 %v521
  %1036 = vmatpush1.bf16.msra.mxu0 %v520
  %1037 = vmatprep.subr.bf16.mxu0 %v525
  %1038 = vmatpush1.bf16.msra.mxu0 %v524
  %1039 = vmatprep.subr.bf16.mxu0 0
  %1040 = vmatpush1.bf16.msra.mxu0 0
  %1041 = vmatprep.subr.bf16.mxu0 0
  %1042 = vmatpush1.bf16.msra.mxu0 0
  %1043 = vmatprep.subr.bf16.mxu0 0
  %1044 = vmatpush1.bf16.msra.mxu0 0
  %1045 = vmatprep.subr.bf16.mxu0 0
  %1046 = vmatpush1.bf16.msra.mxu0 0
  %1047 = vmatprep.subr.bf16.mxu0 0
  %1048 = vmatpush1.bf16.msra.mxu0 0
  %1049 = vmatprep.subr.bf16.mxu0 0
  %1050 = vmatpush1.bf16.msra.mxu0 0
  %1051 = vmatprep.subr.bf16.mxu0 0
  %1052 = vmatpush1.bf16.msra.mxu0 0
  %1053 = vmatprep.subr.bf16.mxu0 0
  %1054 = vmatpush1.bf16.msra.mxu0 0
  %1055 = vmatprep.mubr.bf16.mxu0 0
  %1056 = vmatmul.mubr.bf16.gmra.mrb[0].mxu0 %v981
  %v1057 = vpop.f32.mrb[0].mxu0
  %v1058 = vadd.f32 0.0, %v1057
  %v1059 = vpop.f32.mrb[0].mxu0
  %v1060 = vadd.f32 0.0, %v1059
  %v1061 = vpop.f32.mrb[0].mxu0
  %v1062 = vpop.f32.mrb[0].mxu0
  %1063 = vdwg.mxu0
  %v1064 = vld [vmem:[#allocation2 + $0x80] sm:$0xff]
  %v1065 = vld [vmem:[#allocation2 + $0x88] sm:$0xff]
  %v1066 = vld [vmem:[#allocation2 + $0x90] sm:$0xff]
  %v1067 = vld [vmem:[#allocation2 + $0x98] sm:$0xff]
  %v1068 = vadd.f32 %v1064, %v1017
  %v1069 = vadd.f32 %v1065, %v1019
  %v1070 = vadd.f32 %v1066, %v1058
  %v1071 = vadd.f32 %v1067, %v1060
  %v1072 = vtanh.pop %v1068
  %v1073 = vtanh.pop %v1069
  %v1074 = vtanh.pop %v1070
  %v1075 = vtanh.pop %v1071
  %v1076 = vmul.f32 %v1072, 0.5
  %v1077 = vadd.f32 %v1076, 0.5
  %v1078 = vmul.f32 %v1073, 0.5
  %v1079 = vadd.f32 %v1078, 0.5
  %v1080 = vmul.f32 %v1075, 0.5
  %v1081 = vadd.f32 %v1080, 0.5
  %v1082 = vmul.f32 %v1079, %v978
  %v1083 = vmul.f32 %v1077, %v1074
  %v1084 = vadd.f32 %v1082, %v1083
  %v1085 = vtanh.pop %v1084
  %v1086 = vmul.f32 %v1081, %v1085
  %v1087 = vpack.c.bf16 %v1086, %v1086
  %1088 = vmatprep.subr.bf16.mxu0 %v495
  %1089 = vmatpush1.bf16.msra.mxu0 %v494
  %1090 = vmatprep.subr.bf16.mxu0 %v499
  %1091 = vmatpush1.bf16.msra.mxu0 %v498
  %1092 = vmatprep.subr.bf16.mxu0 %v503
  %1093 = vmatpush1.bf16.msra.mxu0 %v502
  %1094 = vmatprep.subr.bf16.mxu0 %v507
  %1095 = vmatpush1.bf16.msra.mxu0 %v506
  %1096 = vmatprep.subr.bf16.mxu0 %v511
  %1097 = vmatpush1.bf16.msra.mxu0 %v510
  %1098 = vmatprep.subr.bf16.mxu0 %v515
  %1099 = vmatpush1.bf16.msra.mxu0 %v514
  %1100 = vmatprep.subr.bf16.mxu0 %v519
  %1101 = vmatpush1.bf16.msra.mxu0 %v518
  %1102 = vmatprep.subr.bf16.mxu0 %v523
  %1103 = vmatpush1.bf16.msra.mxu0 %v522
  %1104 = vmatprep.subr.bf16.mxu0 0
  %1105 = vmatpush1.bf16.msra.mxu0 0
  %1106 = vmatprep.subr.bf16.mxu0 0
  %1107 = vmatpush1.bf16.msra.mxu0 0
  %1108 = vmatprep.subr.bf16.mxu0 0
  %1109 = vmatpush1.bf16.msra.mxu0 0
  %1110 = vmatprep.subr.bf16.mxu0 0
  %1111 = vmatpush1.bf16.msra.mxu0 0
  %1112 = vmatprep.subr.bf16.mxu0 0
  %1113 = vmatpush1.bf16.msra.mxu0 0
  %1114 = vmatprep.subr.bf16.mxu0 0
  %1115 = vmatpush1.bf16.msra.mxu0 0
  %1116 = vmatprep.subr.bf16.mxu0 0
  %1117 = vmatpush1.bf16.msra.mxu0 0
  %1118 = vmatprep.subr.bf16.mxu0 0
  %1119 = vmatpush1.bf16.msra.mxu0 0
  %1120 = vmatprep.mubr.bf16.mxu0 0
  %1121 = vmatmul.mubr.bf16.gmra.mrb[0].mxu0 %v1087
  %v1122 = vpop.f32.mrb[0].mxu0
  %v1123 = vadd.f32 0.0, %v1122
  %v1124 = vpop.f32.mrb[0].mxu0
  %v1125 = vadd.f32 0.0, %v1124
  %v1126 = vpop.f32.mrb[0].mxu0
  %v1127 = vpop.f32.mrb[0].mxu0
  %1128 = vdwg.mxu0
  %1129 = vmatprep.subr.bf16.mxu0 %v497
  %1130 = vmatpush1.bf16.msra.mxu0 %v496
  %1131 = vmatprep.subr.bf16.mxu0 %v501
  %1132 = vmatpush1.bf16.msra.mxu0 %v500
  %1133 = vmatprep.subr.bf16.mxu0 %v505
  %1134 = vmatpush1.bf16.msra.mxu0 %v504
  %1135 = vmatprep.subr.bf16.mxu0 %v509
  %1136 = vmatpush1.bf16.msra.mxu0 %v508
  %1137 = vmatprep.subr.bf16.mxu0 %v513
  %1138 = vmatpush1.bf16.msra.mxu0 %v512
  %1139 = vmatprep.subr.bf16.mxu0 %v517
  %1140 = vmatpush1.bf16.msra.mxu0 %v516
  %1141 = vmatprep.subr.bf16.mxu0 %v521
  %1142 = vmatpush1.bf16.msra.mxu0 %v520
  %1143 = vmatprep.subr.bf16.mxu0 %v525
  %1144 = vmatpush1.bf16.msra.mxu0 %v524
  %1145 = vmatprep.subr.bf16.mxu0 0
  %1146 = vmatpush1.bf16.msra.mxu0 0
  %1147 = vmatprep.subr.bf16.mxu0 0
  %1148 = vmatpush1.bf16.msra.mxu0 0
  %1149 = vmatprep.subr.bf16.mxu0 0
  %1150 = vmatpush1.bf16.msra.mxu0 0
  %1151 = vmatprep.subr.bf16.mxu0 0
  %1152 = vmatpush1.bf16.msra.mxu0 0
  %1153 = vmatprep.subr.bf16.mxu0 0
  %1154 = vmatpush1.bf16.msra.mxu0 0
  %1155 = vmatprep.subr.bf16.mxu0 0
  %1156 = vmatpush1.bf16.msra.mxu0 0
  %1157 = vmatprep.subr.bf16.mxu0 0
  %1158 = vmatpush1.bf16.msra.mxu0 0
  %1159 = vmatprep.subr.bf16.mxu0 0
  %1160 = vmatpush1.bf16.msra.mxu0 0
  %1161 = vmatprep.mubr.bf16.mxu0 0
  %1162 = vmatmul.mubr.bf16.gmra.mrb[0].mxu0 %v1087
  %v1163 = vpop.f32.mrb[0].mxu0
  %v1164 = vadd.f32 0.0, %v1163
  %v1165 = vpop.f32.mrb[0].mxu0
  %v1166 = vadd.f32 0.0, %v1165
  %v1167 = vpop.f32.mrb[0].mxu0
  %v1168 = vpop.f32.mrb[0].mxu0
  %1169 = vdwg.mxu0
  %v1170 = vld [vmem:[#allocation2 + $0xa0] sm:$0xff]
  %v1171 = vld [vmem:[#allocation2 + $0xa8] sm:$0xff]
  %v1172 = vld [vmem:[#allocation2 + $0xb0] sm:$0xff]
  %v1173 = vld [vmem:[#allocation2 + $0xb8] sm:$0xff]
  %v1174 = vadd.f32 %v1170, %v1123
  %v1175 = vadd.f32 %v1171, %v1125
  %v1176 = vadd.f32 %v1172, %v1164
  %v1177 = vadd.f32 %v1173, %v1166
  %v1178 = vtanh.pop %v1174
  %v1179 = vtanh.pop %v1175
  %v1180 = vtanh.pop %v1176
  %v1181 = vtanh.pop %v1177
  %v1182 = vmul.f32 %v1178, 0.5
  %v1183 = vadd.f32 %v1182, 0.5
  %v1184 = vmul.f32 %v1179, 0.5
  %v1185 = vadd.f32 %v1184, 0.5
  %v1186 = vmul.f32 %v1181, 0.5
  %v1187 = vadd.f32 %v1186, 0.5
  %v1188 = vmul.f32 %v1185, %v1084
  %v1189 = vmul.f32 %v1183, %v1180
  %v1190 = vadd.f32 %v1188, %v1189
  %v1191 = vtanh.pop %v1190
  %v1192 = vmul.f32 %v1187, %v1191
  %v1193 = vpack.c.bf16 %v1192, %v1192
  %1194 = vmatprep.subr.bf16.mxu0 %v495
  %1195 = vmatpush1.bf16.msra.mxu0 %v494
  %1196 = vmatprep.subr.bf16.mxu0 %v499
  %1197 = vmatpush1.bf16.msra.mxu0 %v498
  %1198 = vmatprep.subr.bf16.mxu0 %v503
  %1199 = vmatpush1.bf16.msra.mxu0 %v502
  %1200 = vmatprep.subr.bf16.mxu0 %v507
  %1201 = vmatpush1.bf16.msra.mxu0 %v506
  %1202 = vmatprep.subr.bf16.mxu0 %v511
  %1203 = vmatpush1.bf16.msra.mxu0 %v510
  %1204 = vmatprep.subr.bf16.mxu0 %v515
  %1205 = vmatpush1.bf16.msra.mxu0 %v514
  %1206 = vmatprep.subr.bf16.mxu0 %v519
  %1207 = vmatpush1.bf16.msra.mxu0 %v518
  %1208 = vmatprep.subr.bf16.mxu0 %v523
  %1209 = vmatpush1.bf16.msra.mxu0 %v522
  %1210 = vmatprep.subr.bf16.mxu0 0
  %1211 = vmatpush1.bf16.msra.mxu0 0
  %1212 = vmatprep.subr.bf16.mxu0 0
  %1213 = vmatpush1.bf16.msra.mxu0 0
  %1214 = vmatprep.subr.bf16.mxu0 0
  %1215 = vmatpush1.bf16.msra.mxu0 0
  %1216 = vmatprep.subr.bf16.mxu0 0
  %1217 = vmatpush1.bf16.msra.mxu0 0
  %1218 = vmatprep.subr.bf16.mxu0 0
  %1219 = vmatpush1.bf16.msra.mxu0 0
  %1220 = vmatprep.subr.bf16.mxu0 0
  %1221 = vmatpush1.bf16.msra.mxu0 0
  %1222 = vmatprep.subr.bf16.mxu0 0
  %1223 = vmatpush1.bf16.msra.mxu0 0
  %1224 = vmatprep.subr.bf16.mxu0 0
  %1225 = vmatpush1.bf16.msra.mxu0 0
  %1226 = vmatprep.mubr.bf16.mxu0 0
  %1227 = vmatmul.mubr.bf16.gmra.mrb[0].mxu0 %v1193
  %v1228 = vpop.f32.mrb[0].mxu0
  %v1229 = vadd.f32 0.0, %v1228
  %v1230 = vpop.f32.mrb[0].mxu0
  %v1231 = vadd.f32 0.0, %v1230
  %v1232 = vpop.f32.mrb[0].mxu0
  %v1233 = vpop.f32.mrb[0].mxu0
  %1234 = vdwg.mxu0
  %1235 = vmatprep.subr.bf16.mxu0 %v497
  %1236 = vmatpush1.bf16.msra.mxu0 %v496
  %1237 = vmatprep.subr.bf16.mxu0 %v501
  %1238 = vmatpush1.bf16.msra.mxu0 %v500
  %1239 = vmatprep.subr.bf16.mxu0 %v505
  %1240 = vmatpush1.bf16.msra.mxu0 %v504
  %1241 = vmatprep.subr.bf16.mxu0 %v509
  %1242 = vmatpush1.bf16.msra.mxu0 %v508
  %1243 = vmatprep.subr.bf16.mxu0 %v513
  %1244 = vmatpush1.bf16.msra.mxu0 %v512
  %1245 = vmatprep.subr.bf16.mxu0 %v517
  %1246 = vmatpush1.bf16.msra.mxu0 %v516
  %1247 = vmatprep.subr.bf16.mxu0 %v521
  %1248 = vmatpush1.bf16.msra.mxu0 %v520
  %1249 = vmatprep.subr.bf16.mxu0 %v525
  %1250 = vmatpush1.bf16.msra.mxu0 %v524
  %1251 = vmatprep.subr.bf16.mxu0 0
  %1252 = vmatpush1.bf16.msra.mxu0 0
  %1253 = vmatprep.subr.bf16.mxu0 0
  %1254 = vmatpush1.bf16.msra.mxu0 0
  %1255 = vmatprep.subr.bf16.mxu0 0
  %1256 = vmatpush1.bf16.msra.mxu0 0
  %1257 = vmatprep.subr.bf16.mxu0 0
  %1258 = vmatpush1.bf16.msra.mxu0 0
  %1259 = vmatprep.subr.bf16.mxu0 0
  %1260 = vmatpush1.bf16.msra.mxu0 0
  %1261 = vmatprep.subr.bf16.mxu0 0
  %1262 = vmatpush1.bf16.msra.mxu0 0
  %1263 = vmatprep.subr.bf16.mxu0 0
  %1264 = vmatpush1.bf16.msra.mxu0 0
  %1265 = vmatprep.subr.bf16.mxu0 0
  %1266 = vmatpush1.bf16.msra.mxu0 0
  %1267 = vmatprep.mubr.bf16.mxu0 0
  %1268 = vmatmul.mubr.bf16.gmra.mrb[0].mxu0 %v1193
  %v1269 = vpop.f32.mrb[0].mxu0
  %v1270 = vadd.f32 0.0, %v1269
  %v1271 = vpop.f32.mrb[0].mxu0
  %v1272 = vadd.f32 0.0, %v1271
  %v1273 = vpop.f32.mrb[0].mxu0
  %v1274 = vpop.f32.mrb[0].mxu0
  %1275 = vdwg.mxu0
  %v1276 = vld [vmem:[#allocation2 + $0xc0] sm:$0xff]
  %v1277 = vld [vmem:[#allocation2 + $0xc8] sm:$0xff]
  %v1278 = vld [vmem:[#allocation2 + $0xd0] sm:$0xff]
  %v1279 = vld [vmem:[#allocation2 + $0xd8] sm:$0xff]
  %v1280 = vadd.f32 %v1276, %v1229
  %v1281 = vadd.f32 %v1277, %v1231
  %v1282 = vadd.f32 %v1278, %v1270
  %v1283 = vadd.f32 %v1279, %v1272
  %v1284 = vtanh.pop %v1280
  %v1285 = vtanh.pop %v1281
  %v1286 = vtanh.pop %v1282
  %v1287 = vtanh.pop %v1283
  %v1288 = vmul.f32 %v1284, 0.5
  %v1289 = vadd.f32 %v1288, 0.5
  %v1290 = vmul.f32 %v1285, 0.5
  %v1291 = vadd.f32 %v1290, 0.5
  %v1292 = vmul.f32 %v1287, 0.5
  %v1293 = vadd.f32 %v1292, 0.5
  %v1294 = vmul.f32 %v1291, %v1190
  %v1295 = vmul.f32 %v1289, %v1286
  %v1296 = vadd.f32 %v1294, %v1295
  %v1297 = vtanh.pop %v1296
  %v1298 = vmul.f32 %v1293, %v1297
  %v1299 = vpack.c.bf16 %v1298, %v1298
  %1300 = vmatprep.subr.bf16.mxu0 %v495
  %1301 = vmatpush1.bf16.msra.mxu0 %v494
  %1302 = vmatprep.subr.bf16.mxu0 %v499
  %1303 = vmatpush1.bf16.msra.mxu0 %v498
  %1304 = vmatprep.subr.bf16.mxu0 %v503
  %1305 = vmatpush1.bf16.msra.mxu0 %v502
  %1306 = vmatprep.subr.bf16.mxu0 %v507
  %1307 = vmatpush1.bf16.msra.mxu0 %v506
  %1308 = vmatprep.subr.bf16.mxu0 %v511
  %1309 = vmatpush1.bf16.msra.mxu0 %v510
  %1310 = vmatprep.subr.bf16.mxu0 %v515
  %1311 = vmatpush1.bf16.msra.mxu0 %v514
  %1312 = vmatprep.subr.bf16.mxu0 %v519
  %1313 = vmatpush1.bf16.msra.mxu0 %v518
  %1314 = vmatprep.subr.bf16.mxu0 %v523
  %1315 = vmatpush1.bf16.msra.mxu0 %v522
  %1316 = vmatprep.subr.bf16.mxu0 0
  %1317 = vmatpush1.bf16.msra.mxu0 0
  %1318 = vmatprep.subr.bf16.mxu0 0
  %1319 = vmatpush1.bf16.msra.mxu0 0
  %1320 = vmatprep.subr.bf16.mxu0 0
  %1321 = vmatpush1.bf16.msra.mxu0 0
  %1322 = vmatprep.subr.bf16.mxu0 0
  %1323 = vmatpush1.bf16.msra.mxu0 0
  %1324 = vmatprep.subr.bf16.mxu0 0
  %1325 = vmatpush1.bf16.msra.mxu0 0
  %1326 = vmatprep.subr.bf16.mxu0 0
  %1327 = vmatpush1.bf16.msra.mxu0 0
  %1328 = vmatprep.subr.bf16.mxu0 0
  %1329 = vmatpush1.bf16.msra.mxu0 0
  %1330 = vmatprep.subr.bf16.mxu0 0
  %1331 = vmatpush1.bf16.msra.mxu0 0
  %1332 = vmatprep.mubr.bf16.mxu0 0
  %1333 = vmatmul.mubr.bf16.gmra.mrb[0].mxu0 %v1299
  %v1334 = vpop.f32.mrb[0].mxu0
  %v1335 = vadd.f32 0.0, %v1334
  %v1336 = vpop.f32.mrb[0].mxu0
  %v1337 = vadd.f32 0.0, %v1336
  %v1338 = vpop.f32.mrb[0].mxu0
  %v1339 = vpop.f32.mrb[0].mxu0
  %1340 = vdwg.mxu0
  %1341 = vmatprep.subr.bf16.mxu0 %v497
  %1342 = vmatpush1.bf16.msra.mxu0 %v496
  %1343 = vmatprep.subr.bf16.mxu0 %v501
  %1344 = vmatpush1.bf16.msra.mxu0 %v500
  %1345 = vmatprep.subr.bf16.mxu0 %v505
  %1346 = vmatpush1.bf16.msra.mxu0 %v504
  %1347 = vmatprep.subr.bf16.mxu0 %v509
  %1348 = vmatpush1.bf16.msra.mxu0 %v508
  %1349 = vmatprep.subr.bf16.mxu0 %v513
  %1350 = vmatpush1.bf16.msra.mxu0 %v512
  %1351 = vmatprep.subr.bf16.mxu0 %v517
  %1352 = vmatpush1.bf16.msra.mxu0 %v516
  %1353 = vmatprep.subr.bf16.mxu0 %v521
  %1354 = vmatpush1.bf16.msra.mxu0 %v520
  %1355 = vmatprep.subr.bf16.mxu0 %v525
  %1356 = vmatpush1.bf16.msra.mxu0 %v524
  %1357 = vmatprep.subr.bf16.mxu0 0
  %1358 = vmatpush1.bf16.msra.mxu0 0
  %1359 = vmatprep.subr.bf16.mxu0 0
  %1360 = vmatpush1.bf16.msra.mxu0 0
  %1361 = vmatprep.subr.bf16.mxu0 0
  %1362 = vmatpush1.bf16.msra.mxu0 0
  %1363 = vmatprep.subr.bf16.mxu0 0
  %1364 = vmatpush1.bf16.msra.mxu0 0
  %1365 = vmatprep.subr.bf16.mxu0 0
  %1366 = vmatpush1.bf16.msra.mxu0 0
  %1367 = vmatprep.subr.bf16.mxu0 0
  %1368 = vmatpush1.bf16.msra.mxu0 0
  %1369 = vmatprep.subr.bf16.mxu0 0
  %1370 = vmatpush1.bf16.msra.mxu0 0
  %1371 = vmatprep.subr.bf16.mxu0 0
  %1372 = vmatpush1.bf16.msra.mxu0 0
  %1373 = vmatprep.mubr.bf16.mxu0 0
  %1374 = vmatmul.mubr.bf16.gmra.mrb[0].mxu0 %v1299
  %v1375 = vpop.f32.mrb[0].mxu0
  %v1376 = vadd.f32 0.0, %v1375
  %v1377 = vpop.f32.mrb[0].mxu0
  %v1378 = vadd.f32 0.0, %v1377
  %v1379 = vpop.f32.mrb[0].mxu0
  %v1380 = vpop.f32.mrb[0].mxu0
  %1381 = vdwg.mxu0
  %v1382 = vld [vmem:[#allocation2 + $0xe0] sm:$0xff]
  %v1383 = vld [vmem:[#allocation2 + $0xe8] sm:$0xff]
  %v1384 = vld [vmem:[#allocation2 + $0xf0] sm:$0xff]
  %v1385 = vld [vmem:[#allocation2 + $0xf8] sm:$0xff]
  %v1386 = vadd.f32 %v1382, %v1335
  %v1387 = vadd.f32 %v1383, %v1337
  %v1388 = vadd.f32 %v1384, %v1376
  %v1389 = vadd.f32 %v1385, %v1378
  %v1390 = vtanh.pop %v1386
  %v1391 = vtanh.pop %v1387
  %v1392 = vtanh.pop %v1388
  %v1393 = vtanh.pop %v1389
  %v1394 = vmul.f32 %v1390, 0.5
  %v1395 = vadd.f32 %v1394, 0.5
  %v1396 = vmul.f32 %v1391, 0.5
  %v1397 = vadd.f32 %v1396, 0.5
  %v1398 = vmul.f32 %v1393, 0.5
  %v1399 = vadd.f32 %v1398, 0.5
  %v1400 = vmul.f32 %v1397, %v1296
  %v1401 = vmul.f32 %v1395, %v1392
  %v1402 = vadd.f32 %v1400, %v1401
  %v1403 = vtanh.pop %v1402
  %v1404 = vmul.f32 %v1399, %v1403
  %v1405 = vld [vmem:[%s4] sm:$0xff]
  %v1406 = vld [vmem:[%s4 + $0x8] sm:$0xff]
  %v1407 = vld [vmem:[%s4 + $0x10] sm:$0xff]
  %v1408 = vld [vmem:[%s4 + $0x18] sm:$0xff]
  %v1409 = vld [vmem:[%s4 + $0x20] sm:$0xff]
  %v1410 = vld [vmem:[%s4 + $0x28] sm:$0xff]
  %v1411 = vld [vmem:[%s4 + $0x30] sm:$0xff]
  %v1412 = vld [vmem:[%s4 + $0x38] sm:$0xff]
  %v1413 = vld [vmem:[%s4 + $0x40] sm:$0xff]
  %v1414 = vld [vmem:[%s4 + $0x48] sm:$0xff]
  %v1415 = vld [vmem:[%s4 + $0x50] sm:$0xff]
  %v1416 = vld [vmem:[%s4 + $0x58] sm:$0xff]
  %v1417 = vld [vmem:[%s4 + $0x60] sm:$0xff]
  %v1418 = vld [vmem:[%s4 + $0x68] sm:$0xff]
  %v1419 = vld [vmem:[%s4 + $0x70] sm:$0xff]
  %v1420 = vld [vmem:[%s4 + $0x78] sm:$0xff]
  %v1421 = vld [vmem:[%s5] sm:$0x1]
  %v1423 = vlaneseq
  %v1424 = vshrl.u32 %v1423, 7
  %v1425 = vsub.s32 0, %v1424
  %v1426 = vrot.slane %v1421, %v1425
  %1428 = vmatprep.subr.mxu0 0.0
  %1429 = vmatpush1.msra.mxu0 %v1405
  %1430 = vmatprep.subr.mxu0 0.0
  %1431 = vmatpush1.msra.mxu0 %v1406
  %1432 = vmatprep.subr.mxu0 0.0
  %1433 = vmatpush1.msra.mxu0 %v1407
  %1434 = vmatprep.subr.mxu0 0.0
  %1435 = vmatpush1.msra.mxu0 %v1408
  %1436 = vmatprep.subr.mxu0 0.0
  %1437 = vmatpush1.msra.mxu0 %v1409
  %1438 = vmatprep.subr.mxu0 0.0
  %1439 = vmatpush1.msra.mxu0 %v1410
  %1440 = vmatprep.subr.mxu0 0.0
  %1441 = vmatpush1.msra.mxu0 %v1411
  %1442 = vmatprep.subr.mxu0 0.0
  %1443 = vmatpush1.msra.mxu0 %v1412
  %1444 = vmatprep.subr.mxu0 0.0
  %1445 = vmatpush1.msra.mxu0 %v1413
  %1446 = vmatprep.subr.mxu0 0.0
  %1447 = vmatpush1.msra.mxu0 %v1414
  %1448 = vmatprep.subr.mxu0 0.0
  %1449 = vmatpush1.msra.mxu0 %v1415
  %1450 = vmatprep.subr.mxu0 0.0
  %1451 = vmatpush1.msra.mxu0 %v1416
  %1452 = vmatprep.subr.mxu0 0.0
  %1453 = vmatpush1.msra.mxu0 %v1417
  %1454 = vmatprep.subr.mxu0 0.0
  %1455 = vmatpush1.msra.mxu0 %v1418
  %1456 = vmatprep.subr.mxu0 0.0
  %1457 = vmatpush1.msra.mxu0 %v1419
  %1458 = vmatprep.subr.mxu0 0.0
  %1459 = vmatpush1.msra.mxu0 %v1420
  %1460 = vmatprep.subr.mxu0 0.0
  %1461 = vmatpush1.msra.mxu0 0.0
  %1462 = vmatprep.subr.mxu0 0.0
  %1463 = vmatpush1.msra.mxu0 0.0
  %1464 = vmatprep.subr.mxu0 0.0
  %1465 = vmatpush1.msra.mxu0 0.0
  %1466 = vmatprep.subr.mxu0 0.0
  %1467 = vmatpush1.msra.mxu0 0.0
  %1468 = vmatprep.subr.mxu0 0.0
  %1469 = vmatpush1.msra.mxu0 0.0
  %1470 = vmatprep.subr.mxu0 0.0
  %1471 = vmatpush1.msra.mxu0 0.0
  %1472 = vmatprep.subr.mxu0 0.0
  %1473 = vmatpush1.msra.mxu0 0.0
  %1474 = vmatprep.subr.mxu0 0.0
  %1475 = vmatpush1.msra.mxu0 0.0
  %1476 = vmatprep.subr.mxu0 0.0
  %1477 = vmatpush1.msra.mxu0 0.0
  %1478 = vmatprep.subr.mxu0 0.0
  %1479 = vmatpush1.msra.mxu0 0.0
  %1480 = vmatprep.subr.mxu0 0.0
  %1481 = vmatpush1.msra.mxu0 0.0
  %1482 = vmatprep.subr.mxu0 0.0
  %1483 = vmatpush1.msra.mxu0 0.0
  %1484 = vmatprep.subr.mxu0 0.0
  %1485 = vmatpush1.msra.mxu0 0.0
  %1486 = vmatprep.subr.mxu0 0.0
  %1487 = vmatpush1.msra.mxu0 0.0
  %1488 = vmatprep.subr.mxu0 0.0
  %1489 = vmatpush1.msra.mxu0 0.0
  %1490 = vmatprep.subr.mxu0 0.0
  %1491 = vmatpush1.msra.mxu0 0.0
  %1492 = vmatprep.mubr.f32.mxu0 0.0
  %1493 = vmatmul.mubr.f32.gmra.mrb[0].mxu0 %v1404
  %v1494 = vpop.f32.mrb[0].mxu0
  %v1495 = vadd.f32 %v1426, %v1494
  %v1496 = vpop.f32.mrb[0].mxu0
  %1497 = vdwg.mxu0
  %1498 = vst [vmem:[%s6] sm:$0xff] %v1495
  // Predicated region
  $region26: #{my_rnn_forward.1} parent=0 // pred_check
    _
  $region27: #{my_rnn_forward.1} parent=0 // pred_check_branch
    %1500 = sbr.rel (0) target = $region29
  $region28: #{my_rnn_forward.1} parent=0 // pred_region
    _
  $region29: #{my_rnn_forward.1} parent=0 // pred_fallthru
    _
  // Predicated region
  $region30: #{my_rnn_forward.1} parent=0 // pred_check
    _
  $region31: #{my_rnn_forward.1} parent=0 // pred_check_branch
    %1502 = sbr.rel (0) target = $region33
  $region32: #{my_rnn_forward.1} parent=0 // pred_region
    _
  $region33: #{my_rnn_forward.1} parent=0 // pred_fallthru
    _

</llo_original>
